<compile_context>
chip_gen: v7x
topology: tpu7x:2x2x1
jax: 0.10.0
libtpu: 0.0.40
codegen_flags: <defaults>
</compile_context>

<pallas_src>
import jax
import jax.numpy as jnp
from jax.experimental import pallas as pl
from jax.experimental.pallas import tpu as pltpu


def _adapter_kernel(x_ref, w_ref, b_ref, o_ref):
    # x_ref: (tm, 9*cin) bf16   w_ref: (9*cin, cout) bf16   b_ref: (1, cout) f32
    acc = jnp.dot(x_ref[...], w_ref[...], preferred_element_type=jnp.float32)
    acc = acc + b_ref[...]                              # (1, cout) broadcast
    o_ref[...] = jnp.maximum(acc, 0.0).astype(o_ref.dtype)


def _num_grid_steps(batch, rows):
    """B parallel steps on dual-TC v7x, 1 step on single-TC v5e/v6e."""
    try:
        kind = jax.devices()[0].device_kind.lower()
    except Exception:  # pragma: no cover - defensive
        kind = ""
    if "v7" in kind and batch > 1 and rows % batch == 0 and (rows // batch) % 8 == 0:
        return batch
    return 1


def resnet_adapter_forward(x_nchw, weight_oihw, bias, *, reduce):
    """x_nchw: (B, C, H, W); weight_oihw: (Cout, Cin_conv, 3, 3); bias: (Cout,)."""
    B, C, H, W = x_nchw.shape
    cout, cin, kh, kw = weight_oihw.shape
    assert (kh, kw) == (3, 3)

    # ---- wrapper glue (small, fusable XLA ops) ------------------------------
    if reduce:
        assert C == 4 * cin
        # channel c = 4*g + r -> groups of 4 consecutive channels, max over r.
        x = jnp.max(x_nchw.reshape(B, cin, 4, H, W), axis=2)   # (B, cin, H, W) f32
    else:
        assert C == cin
        x = x_nchw

    x = jnp.transpose(x, (0, 2, 3, 1))                          # NHWC (B, H, W, cin)
    xp = jnp.pad(x, ((0, 0), (1, 1), (1, 1), (0, 0)))           # (B, H+2, W+2, cin)

    # Full im2col: column index = (dy*3 + dx)*cin + c.
    cols = [xp[:, dy:dy + H, dx:dx + W, :]
            for dy in range(3) for dx in range(3)]
    K = 9 * cin
    M = B * H * W
    xcol = jnp.concatenate(cols, axis=-1).reshape(M, K).astype(jnp.bfloat16)

    # Weights OIHW -> (dy, dx, c, o) -> (9*cin, cout), matching im2col columns.
    w = jnp.transpose(weight_oihw, (2, 3, 1, 0)).reshape(K, cout)
    w = w.astype(jnp.bfloat16)
    b2 = bias.reshape(1, cout).astype(jnp.float32)

    n_steps = _num_grid_steps(B, M)
    tm = M // n_steps

    out_flat = pl.pallas_call(
        _adapter_kernel,
        out_shape=jax.ShapeDtypeStruct((M, cout), x_nchw.dtype),
        grid_spec=pltpu.PrefetchScalarGridSpec(
            num_scalar_prefetch=0,
            grid=(n_steps,),
            in_specs=[
                pl.BlockSpec((tm, K), lambda i: (i, 0)),
                pl.BlockSpec((K, cout), lambda i: (0, 0)),
                pl.BlockSpec((1, cout), lambda i: (0, 0)),
            ],
            out_specs=pl.BlockSpec((tm, cout), lambda i: (i, 0)),
        ),
        compiler_params=pltpu.CompilerParams(
            dimension_semantics=("parallel",)),
    )(xcol, w, b2)

    # (B*H*W, cout) -> (B, cout, H, W): one reshape + one transpose.
    out = out_flat.reshape(B, H, W, cout)
    return jnp.transpose(out, (0, 3, 1, 2))


def make_params(key, in1, out):
    """Deterministic synthetic parameters matching the module's shapes."""
    reduce = in1 > 64
    cin = in1 // 4 if reduce else in1
    kw_, kb_ = jax.random.split(key)
    weight = jax.random.normal(kw_, (out, cin, 3, 3), jnp.float32) * 0.1
    bias = jax.random.normal(kb_, (out,), jnp.float32) * 0.1
    return weight, bias, reduce


def ref_forward(x, weight, bias, reduce):
    """Pure-JAX reference mirroring the PyTorch forward (HIGHEST precision)."""
    if reduce:
        B, C, H, W = x.shape
        x = jnp.max(x.reshape(B, C // 4, 4, H, W), axis=2)
    y = jax.lax.conv_general_dilated(
        x, weight, window_strides=(1, 1), padding=((1, 1), (1, 1)),
        dimension_numbers=("NCHW", "OIHW", "NCHW"),
        precision=jax.lax.Precision.HIGHEST)
    y = y + bias.reshape(1, -1, 1, 1)
    return jnp.maximum(y, 0.0)


def _rel_err(a, b):
    return float(jnp.linalg.norm((a - b).ravel()) /
                 (jnp.linalg.norm(b.ravel()) + 1e-12))


if __name__ == "__main__":
    key = jax.random.PRNGKey(0)
    k1, k2, k3, k4 = jax.random.split(key, 4)
    B, H, W = 2, 16, 16

    # Case 1: default resnet_adapter(in1=64, out=64) -> no channel reduction.
    in1, out = 64, 64
    w1, b1, red1 = make_params(k1, in1, out)
    x1 = jax.random.normal(k2, (B, in1, H, W), jnp.float32)
    y1 = jax.block_until_ready(resnet_adapter_forward(x1, w1, b1, reduce=red1))
    r1 = ref_forward(x1, w1, b1, red1)
    e1 = _rel_err(y1, r1)
    assert e1 < 2e-2, f"rel err (no-reduce path): {e1}"

    # Case 2: resnet_adapter(in1=128, out=64) -> 4-way channel-group max + conv.
    in1, out = 128, 64
    w2, b2, red2 = make_params(k3, in1, out)
    x2 = jax.random.normal(k4, (B, in1, H, W), jnp.float32)
    y2 = jax.block_until_ready(resnet_adapter_forward(x2, w2, b2, reduce=red2))
    r2 = ref_forward(x2, w2, b2, red2)
    e2 = _rel_err(y2, r2)
    assert e2 < 2e-2, f"rel err (reduce path): {e2}"

    print("KERNEL_OK")
</pallas_src>

<mosaic_0001>
module attributes {stable_mosaic.version = 11 : i64} {
  func.func @_adapter_kernel(%arg0: i32, %arg1: memref<512x576xbf16, #tpu.memory_space<vmem>>, %arg2: memref<576x64xbf16, #tpu.memory_space<vmem>>, %arg3: memref<1x64xf32, #tpu.memory_space<vmem>>, %arg4: memref<512x64xf32, #tpu.memory_space<vmem>>) attributes {dimension_semantics = [#tpu.dimension_semantics<parallel>], iteration_bounds = array<i64: 1>, scalar_prefetch = 0 : i64, scratch_operands = 0 : i64, tpu.core_type = #tpu.core_type<tc>, window_params = [{transform_indices = @transform_0, window_bounds = array<i64: 512, 576>}, {pipeline_mode = #tpu.pipeline_mode<synchronous>, transform_indices = @transform_1, window_bounds = array<i64: 576, 64>}, {pipeline_mode = #tpu.pipeline_mode<synchronous>, transform_indices = @transform_2, window_bounds = array<i64: 1, 64>}, {transform_indices = @transform_3, window_bounds = array<i64: 512, 64>}]} {
    %c0 = arith.constant 0 : index
    %c0_0 = arith.constant 0 : index
    %0 = vector.load %arg1[%c0, %c0_0] : memref<512x576xbf16, #tpu.memory_space<vmem>>, vector<512x576xbf16>
    %c0_1 = arith.constant 0 : index
    %c0_2 = arith.constant 0 : index
    %1 = vector.load %arg2[%c0_1, %c0_2] : memref<576x64xbf16, #tpu.memory_space<vmem>>, vector<576x64xbf16>
    %cst = arith.constant dense<0.000000e+00> : vector<512x64xf32>
    %2 = tpu.matmul %0, %1, %cst {dimension_numbers = #tpu.dot_dimension_numbers<[1], [0], [0], [1], [0, 0, 1, 1], [], []>} : vector<512x576xbf16>, vector<576x64xbf16>, vector<512x64xf32> -> vector<512x64xf32>
    %c0_3 = arith.constant 0 : index
    %c0_4 = arith.constant 0 : index
    %3 = vector.load %arg3[%c0_3, %c0_4] : memref<1x64xf32, #tpu.memory_space<vmem>>, vector<1x64xf32>
    %4 = vector.broadcast %3 : vector<1x64xf32> to vector<512x64xf32>
    %5 = arith.addf %2, %4 : vector<512x64xf32>
    %cst_5 = arith.constant 0.000000e+00 : f32
    %6 = vector.broadcast %cst_5 : f32 to vector<512x64xf32>
    %7 = arith.maximumf %5, %6 : vector<512x64xf32>
    %c0_6 = arith.constant 0 : index
    %c0_7 = arith.constant 0 : index
    %8 = vector.load %arg4[%c0_6, %c0_7] : memref<512x64xf32, #tpu.memory_space<vmem>>, vector<512x64xf32>
    tpu.vector_store %arg4[%c0_6, %c0_7], %7 {strides = array<i32>} : memref<512x64xf32, #tpu.memory_space<vmem>>, vector<512x64xf32>,
    return
  }
  func.func @transform_0(%arg0: i32) -> (i32, i32) {
    %c0_i32 = arith.constant 0 : i32
    %c0_i32_0 = arith.constant 0 : i32
    return %arg0, %c0_i32 : i32, i32
  }
  func.func @transform_1(%arg0: i32) -> (i32, i32) {
    %c0_i32 = arith.constant 0 : i32
    %c0_i32_0 = arith.constant 0 : i32
    %c0_i32_1 = arith.constant 0 : i32
    return %c0_i32, %c0_i32_0 : i32, i32
  }
  func.func @transform_2(%arg0: i32) -> (i32, i32) {
    %c0_i32 = arith.constant 0 : i32
    %c0_i32_0 = arith.constant 0 : i32
    %c0_i32_1 = arith.constant 0 : i32
    return %c0_i32, %c0_i32_0 : i32, i32
  }
  func.func @transform_3(%arg0: i32) -> (i32, i32) {
    %c0_i32 = arith.constant 0 : i32
    %c0_i32_0 = arith.constant 0 : i32
    return %arg0, %c0_i32 : i32, i32
  }
}

</mosaic_0001>

<llo_original>
// kernel: tpu_custom_call.1
$region0: #{tpu_custom_call.1}
  #allocation0 [shape = 'u32[]', space=smem, size = 0x4, offset = 0x4, fixed_abs, tag = 'smem constant byte address 0x4 - core index']
  #allocation1 [shape = 'u32[144,128]{1,0:T(1,128)}', space=vmem, size = 0x12000, scoped, tag = 'internal scratch']
  %s0 = inlined_call_operand.vmem [shape: bf16[512,576], index: 0, kind: input, shape index: {}]
  %s1 = inlined_call_operand.vmem [shape: bf16[576,64], index: 1, kind: input, shape index: {}]
  %s2 = inlined_call_operand.vmem [shape: f32[1,64], index: 2, kind: input, shape index: {}]
  %s3 = inlined_call_operand.vmem [shape: f32[512,64], index: 3, kind: output, shape index: {}]
  %s4 = sld [smem:[#allocation0]]
  $region22: #{tpu_custom_call.1} parent=0
    _
  %s6 = ssub.s32 1, %s4
  %s7 = scalar_select 0, %s6, %s4
  // Predicated region
  $region2: #{tpu_custom_call.1} parent=0 // pred_check
    _
  $region3: #{tpu_custom_call.1} parent=0 // pred_check_branch
    %9 = sbr.rel (0) target = $region5
  $region4: #{tpu_custom_call.1} parent=0 // pred_region
    _
  $region5: #{tpu_custom_call.1} parent=0 // pred_fallthru
    _
  // Predicated region
  $region6: #{tpu_custom_call.1} parent=0 // pred_check
    _
  $region7: #{tpu_custom_call.1} parent=0 // pred_check_branch
    %11 = sbr.rel (0) target = $region9
  $region8: #{tpu_custom_call.1} parent=0 // pred_region
    _
  $region9: #{tpu_custom_call.1} parent=0 // pred_fallthru
    _
  // Predicated region
  $region10: #{tpu_custom_call.1} parent=0 // pred_check
    _
  $region11: #{tpu_custom_call.1} parent=0 // pred_check_branch
    %13 = sbr.rel (0) target = $region13
  $region12: #{tpu_custom_call.1} parent=0 // pred_region
    _
  $region13: #{tpu_custom_call.1} parent=0 // pred_fallthru
    _
  %v15 = vld [vmem:[%s0] sm:$0xff]
  %v16 = vld [vmem:[%s0 + $0x8] sm:$0xff]
  %v17 = vld [vmem:[%s0 + $0x10] sm:$0xf]
  %v18 = vld [vmem:[%s0 + $0x14] sm:$0xff]
  %v19 = vld [vmem:[%s0 + $0x1c] sm:$0xff]
  %v20 = vld [vmem:[%s0 + $0x24] sm:$0xf]
  %v21 = vld [vmem:[%s0 + $0x28] sm:$0xff]
  %v22 = vld [vmem:[%s0 + $0x30] sm:$0xff]
  %v23 = vld [vmem:[%s0 + $0x38] sm:$0xf]
  %v24 = vld [vmem:[%s0 + $0x3c] sm:$0xff]
  %v25 = vld [vmem:[%s0 + $0x44] sm:$0xff]
  %v26 = vld [vmem:[%s0 + $0x4c] sm:$0xf]
  %v27 = vld [vmem:[%s0 + $0x50] sm:$0xff]
  %v28 = vld [vmem:[%s0 + $0x58] sm:$0xff]
  %v29 = vld [vmem:[%s0 + $0x60] sm:$0xf]
  %v30 = vld [vmem:[%s0 + $0x64] sm:$0xff]
  %v31 = vld [vmem:[%s0 + $0x6c] sm:$0xff]
  %v32 = vld [vmem:[%s0 + $0x74] sm:$0xf]
  %v33 = vld [vmem:[%s0 + $0x78] sm:$0xff]
  %v34 = vld [vmem:[%s0 + $0x80] sm:$0xff]
  %v35 = vld [vmem:[%s0 + $0x88] sm:$0xf]
  %v36 = vld [vmem:[%s0 + $0x8c] sm:$0xff]
  %v37 = vld [vmem:[%s0 + $0x94] sm:$0xff]
  %v38 = vld [vmem:[%s0 + $0x9c] sm:$0xf]
  %v39 = vld [vmem:[%s0 + $0xa0] sm:$0xff]
  %v40 = vld [vmem:[%s0 + $0xa8] sm:$0xff]
  %v41 = vld [vmem:[%s0 + $0xb0] sm:$0xf]
  %v42 = vld [vmem:[%s0 + $0xb4] sm:$0xff]
  %v43 = vld [vmem:[%s0 + $0xbc] sm:$0xff]
  %v44 = vld [vmem:[%s0 + $0xc4] sm:$0xf]
  %v45 = vld [vmem:[%s0 + $0xc8] sm:$0xff]
  %v46 = vld [vmem:[%s0 + $0xd0] sm:$0xff]
  %v47 = vld [vmem:[%s0 + $0xd8] sm:$0xf]
  %v48 = vld [vmem:[%s0 + $0xdc] sm:$0xff]
  %v49 = vld [vmem:[%s0 + $0xe4] sm:$0xff]
  %v50 = vld [vmem:[%s0 + $0xec] sm:$0xf]
  %v51 = vld [vmem:[%s0 + $0xf0] sm:$0xff]
  %v52 = vld [vmem:[%s0 + $0xf8] sm:$0xff]
  %v53 = vld [vmem:[%s0 + $0x100] sm:$0xf]
  %v54 = vld [vmem:[%s0 + $0x104] sm:$0xff]
  %v55 = vld [vmem:[%s0 + $0x10c] sm:$0xff]
  %v56 = vld [vmem:[%s0 + $0x114] sm:$0xf]
  %v57 = vld [vmem:[%s0 + $0x118] sm:$0xff]
  %v58 = vld [vmem:[%s0 + $0x120] sm:$0xff]
  %v59 = vld [vmem:[%s0 + $0x128] sm:$0xf]
  %v60 = vld [vmem:[%s0 + $0x12c] sm:$0xff]
  %v61 = vld [vmem:[%s0 + $0x134] sm:$0xff]
  %v62 = vld [vmem:[%s0 + $0x13c] sm:$0xf]
  %v63 = vld [vmem:[%s0 + $0x140] sm:$0xff]
  %v64 = vld [vmem:[%s0 + $0x148] sm:$0xff]
  %v65 = vld [vmem:[%s0 + $0x150] sm:$0xf]
  %v66 = vld [vmem:[%s0 + $0x154] sm:$0xff]
  %v67 = vld [vmem:[%s0 + $0x15c] sm:$0xff]
  %v68 = vld [vmem:[%s0 + $0x164] sm:$0xf]
  %v69 = vld [vmem:[%s0 + $0x168] sm:$0xff]
  %v70 = vld [vmem:[%s0 + $0x170] sm:$0xff]
  %v71 = vld [vmem:[%s0 + $0x178] sm:$0xf]
  %v72 = vld [vmem:[%s0 + $0x17c] sm:$0xff]
  %v73 = vld [vmem:[%s0 + $0x184] sm:$0xff]
  %v74 = vld [vmem:[%s0 + $0x18c] sm:$0xf]
  %v75 = vld [vmem:[%s0 + $0x190] sm:$0xff]
  %v76 = vld [vmem:[%s0 + $0x198] sm:$0xff]
  %v77 = vld [vmem:[%s0 + $0x1a0] sm:$0xf]
  %v78 = vld [vmem:[%s0 + $0x1a4] sm:$0xff]
  %v79 = vld [vmem:[%s0 + $0x1ac] sm:$0xff]
  %v80 = vld [vmem:[%s0 + $0x1b4] sm:$0xf]
  %v81 = vld [vmem:[%s0 + $0x1b8] sm:$0xff]
  %v82 = vld [vmem:[%s0 + $0x1c0] sm:$0xff]
  %v83 = vld [vmem:[%s0 + $0x1c8] sm:$0xf]
  %v84 = vld [vmem:[%s0 + $0x1cc] sm:$0xff]
  %v85 = vld [vmem:[%s0 + $0x1d4] sm:$0xff]
  %v86 = vld [vmem:[%s0 + $0x1dc] sm:$0xf]
  %v87 = vld [vmem:[%s0 + $0x1e0] sm:$0xff]
  %v88 = vld [vmem:[%s0 + $0x1e8] sm:$0xff]
  %v89 = vld [vmem:[%s0 + $0x1f0] sm:$0xf]
  %v90 = vld [vmem:[%s0 + $0x1f4] sm:$0xff]
  %v91 = vld [vmem:[%s0 + $0x1fc] sm:$0xff]
  %v92 = vld [vmem:[%s0 + $0x204] sm:$0xf]
  %v93 = vld [vmem:[%s0 + $0x208] sm:$0xff]
  %v94 = vld [vmem:[%s0 + $0x210] sm:$0xff]
  %v95 = vld [vmem:[%s0 + $0x218] sm:$0xf]
  %v96 = vld [vmem:[%s0 + $0x21c] sm:$0xff]
  %v97 = vld [vmem:[%s0 + $0x224] sm:$0xff]
  %v98 = vld [vmem:[%s0 + $0x22c] sm:$0xf]
  %v99 = vld [vmem:[%s0 + $0x230] sm:$0xff]
  %v100 = vld [vmem:[%s0 + $0x238] sm:$0xff]
  %v101 = vld [vmem:[%s0 + $0x240] sm:$0xf]
  %v102 = vld [vmem:[%s0 + $0x244] sm:$0xff]
  %v103 = vld [vmem:[%s0 + $0x24c] sm:$0xff]
  %v104 = vld [vmem:[%s0 + $0x254] sm:$0xf]
  %v105 = vld [vmem:[%s0 + $0x258] sm:$0xff]
  %v106 = vld [vmem:[%s0 + $0x260] sm:$0xff]
  %v107 = vld [vmem:[%s0 + $0x268] sm:$0xf]
  %v108 = vld [vmem:[%s0 + $0x26c] sm:$0xff]
  %v109 = vld [vmem:[%s0 + $0x274] sm:$0xff]
  %v110 = vld [vmem:[%s0 + $0x27c] sm:$0xf]
  %v111 = vld [vmem:[%s0 + $0x280] sm:$0xff]
  %v112 = vld [vmem:[%s0 + $0x288] sm:$0xff]
  %v113 = vld [vmem:[%s0 + $0x290] sm:$0xf]
  %v114 = vld [vmem:[%s0 + $0x294] sm:$0xff]
  %v115 = vld [vmem:[%s0 + $0x29c] sm:$0xff]
  %v116 = vld [vmem:[%s0 + $0x2a4] sm:$0xf]
  %v117 = vld [vmem:[%s0 + $0x2a8] sm:$0xff]
  %v118 = vld [vmem:[%s0 + $0x2b0] sm:$0xff]
  %v119 = vld [vmem:[%s0 + $0x2b8] sm:$0xf]
  %v120 = vld [vmem:[%s0 + $0x2bc] sm:$0xff]
  %v121 = vld [vmem:[%s0 + $0x2c4] sm:$0xff]
  %v122 = vld [vmem:[%s0 + $0x2cc] sm:$0xf]
  %v123 = vld [vmem:[%s0 + $0x2d0] sm:$0xff]
  %v124 = vld [vmem:[%s0 + $0x2d8] sm:$0xff]
  %v125 = vld [vmem:[%s0 + $0x2e0] sm:$0xf]
  %v126 = vld [vmem:[%s0 + $0x2e4] sm:$0xff]
  %v127 = vld [vmem:[%s0 + $0x2ec] sm:$0xff]
  %v128 = vld [vmem:[%s0 + $0x2f4] sm:$0xf]
  %v129 = vld [vmem:[%s0 + $0x2f8] sm:$0xff]
  %v130 = vld [vmem:[%s0 + $0x300] sm:$0xff]
  %v131 = vld [vmem:[%s0 + $0x308] sm:$0xf]
  %v132 = vld [vmem:[%s0 + $0x30c] sm:$0xff]
  %v133 = vld [vmem:[%s0 + $0x314] sm:$0xff]
  %v134 = vld [vmem:[%s0 + $0x31c] sm:$0xf]
  %v135 = vld [vmem:[%s0 + $0x320] sm:$0xff]
  %v136 = vld [vmem:[%s0 + $0x328] sm:$0xff]
  %v137 = vld [vmem:[%s0 + $0x330] sm:$0xf]
  %v138 = vld [vmem:[%s0 + $0x334] sm:$0xff]
  %v139 = vld [vmem:[%s0 + $0x33c] sm:$0xff]
  %v140 = vld [vmem:[%s0 + $0x344] sm:$0xf]
  %v141 = vld [vmem:[%s0 + $0x348] sm:$0xff]
  %v142 = vld [vmem:[%s0 + $0x350] sm:$0xff]
  %v143 = vld [vmem:[%s0 + $0x358] sm:$0xf]
  %v144 = vld [vmem:[%s0 + $0x35c] sm:$0xff]
  %v145 = vld [vmem:[%s0 + $0x364] sm:$0xff]
  %v146 = vld [vmem:[%s0 + $0x36c] sm:$0xf]
  %v147 = vld [vmem:[%s0 + $0x370] sm:$0xff]
  %v148 = vld [vmem:[%s0 + $0x378] sm:$0xff]
  %v149 = vld [vmem:[%s0 + $0x380] sm:$0xf]
  %v150 = vld [vmem:[%s0 + $0x384] sm:$0xff]
  %v151 = vld [vmem:[%s0 + $0x38c] sm:$0xff]
  %v152 = vld [vmem:[%s0 + $0x394] sm:$0xf]
  %v153 = vld [vmem:[%s0 + $0x398] sm:$0xff]
  %v154 = vld [vmem:[%s0 + $0x3a0] sm:$0xff]
  %v155 = vld [vmem:[%s0 + $0x3a8] sm:$0xf]
  %v156 = vld [vmem:[%s0 + $0x3ac] sm:$0xff]
  %v157 = vld [vmem:[%s0 + $0x3b4] sm:$0xff]
  %v158 = vld [vmem:[%s0 + $0x3bc] sm:$0xf]
  %v159 = vld [vmem:[%s0 + $0x3c0] sm:$0xff]
  %v160 = vld [vmem:[%s0 + $0x3c8] sm:$0xff]
  %v161 = vld [vmem:[%s0 + $0x3d0] sm:$0xf]
  %v162 = vld [vmem:[%s0 + $0x3d4] sm:$0xff]
  %v163 = vld [vmem:[%s0 + $0x3dc] sm:$0xff]
  %v164 = vld [vmem:[%s0 + $0x3e4] sm:$0xf]
  %v165 = vld [vmem:[%s0 + $0x3e8] sm:$0xff]
  %v166 = vld [vmem:[%s0 + $0x3f0] sm:$0xff]
  %v167 = vld [vmem:[%s0 + $0x3f8] sm:$0xf]
  %v168 = vld [vmem:[%s0 + $0x3fc] sm:$0xff]
  %v169 = vld [vmem:[%s0 + $0x404] sm:$0xff]
  %v170 = vld [vmem:[%s0 + $0x40c] sm:$0xf]
  %v171 = vld [vmem:[%s0 + $0x410] sm:$0xff]
  %v172 = vld [vmem:[%s0 + $0x418] sm:$0xff]
  %v173 = vld [vmem:[%s0 + $0x420] sm:$0xf]
  %v174 = vld [vmem:[%s0 + $0x424] sm:$0xff]
  %v175 = vld [vmem:[%s0 + $0x42c] sm:$0xff]
  %v176 = vld [vmem:[%s0 + $0x434] sm:$0xf]
  %v177 = vld [vmem:[%s0 + $0x438] sm:$0xff]
  %v178 = vld [vmem:[%s0 + $0x440] sm:$0xff]
  %v179 = vld [vmem:[%s0 + $0x448] sm:$0xf]
  %v180 = vld [vmem:[%s0 + $0x44c] sm:$0xff]
  %v181 = vld [vmem:[%s0 + $0x454] sm:$0xff]
  %v182 = vld [vmem:[%s0 + $0x45c] sm:$0xf]
  %v183 = vld [vmem:[%s0 + $0x460] sm:$0xff]
  %v184 = vld [vmem:[%s0 + $0x468] sm:$0xff]
  %v185 = vld [vmem:[%s0 + $0x470] sm:$0xf]
  %v186 = vld [vmem:[%s0 + $0x474] sm:$0xff]
  %v187 = vld [vmem:[%s0 + $0x47c] sm:$0xff]
  %v188 = vld [vmem:[%s0 + $0x484] sm:$0xf]
  %v189 = vld [vmem:[%s0 + $0x488] sm:$0xff]
  %v190 = vld [vmem:[%s0 + $0x490] sm:$0xff]
  %v191 = vld [vmem:[%s0 + $0x498] sm:$0xf]
  %v192 = vld [vmem:[%s0 + $0x49c] sm:$0xff]
  %v193 = vld [vmem:[%s0 + $0x4a4] sm:$0xff]
  %v194 = vld [vmem:[%s0 + $0x4ac] sm:$0xf]
  %v195 = vld [vmem:[%s0 + $0x4b0] sm:$0xff]
  %v196 = vld [vmem:[%s0 + $0x4b8] sm:$0xff]
  %v197 = vld [vmem:[%s0 + $0x4c0] sm:$0xf]
  %v198 = vld [vmem:[%s0 + $0x4c4] sm:$0xff]
  %v199 = vld [vmem:[%s0 + $0x4cc] sm:$0xff]
  %v200 = vld [vmem:[%s0 + $0x4d4] sm:$0xf]
  %v201 = vld [vmem:[%s0 + $0x4d8] sm:$0xff]
  %v202 = vld [vmem:[%s0 + $0x4e0] sm:$0xff]
  %v203 = vld [vmem:[%s0 + $0x4e8] sm:$0xf]
  %v204 = vld [vmem:[%s0 + $0x4ec] sm:$0xff]
  %v205 = vld [vmem:[%s0 + $0x4f4] sm:$0xff]
  %v206 = vld [vmem:[%s0 + $0x4fc] sm:$0xf]
  %v207 = vld [vmem:[%s1] sm:$0xf]
  %v208 = vld [vmem:[%s1 + $0x4] sm:$0xf]
  %v209 = vld [vmem:[%s1 + $0x8] sm:$0xf]
  %v210 = vld [vmem:[%s1 + $0xc] sm:$0xf]
  %v211 = vld [vmem:[%s1 + $0x10] sm:$0xf]
  %v212 = vld [vmem:[%s1 + $0x14] sm:$0xf]
  %v213 = vld [vmem:[%s1 + $0x18] sm:$0xf]
  %v214 = vld [vmem:[%s1 + $0x1c] sm:$0xf]
  %v215 = vld [vmem:[%s1 + $0x20] sm:$0xf]
  %v216 = vld [vmem:[%s1 + $0x24] sm:$0xf]
  %v217 = vld [vmem:[%s1 + $0x28] sm:$0xf]
  %v218 = vld [vmem:[%s1 + $0x2c] sm:$0xf]
  %v219 = vld [vmem:[%s1 + $0x30] sm:$0xf]
  %v220 = vld [vmem:[%s1 + $0x34] sm:$0xf]
  %v221 = vld [vmem:[%s1 + $0x38] sm:$0xf]
  %v222 = vld [vmem:[%s1 + $0x3c] sm:$0xf]
  %v223 = vld [vmem:[%s1 + $0x40] sm:$0xf]
  %v224 = vld [vmem:[%s1 + $0x44] sm:$0xf]
  %v225 = vld [vmem:[%s1 + $0x48] sm:$0xf]
  %v226 = vld [vmem:[%s1 + $0x4c] sm:$0xf]
  %v227 = vld [vmem:[%s1 + $0x50] sm:$0xf]
  %v228 = vld [vmem:[%s1 + $0x54] sm:$0xf]
  %v229 = vld [vmem:[%s1 + $0x58] sm:$0xf]
  %v230 = vld [vmem:[%s1 + $0x5c] sm:$0xf]
  %v231 = vld [vmem:[%s1 + $0x60] sm:$0xf]
  %v232 = vld [vmem:[%s1 + $0x64] sm:$0xf]
  %v233 = vld [vmem:[%s1 + $0x68] sm:$0xf]
  %v234 = vld [vmem:[%s1 + $0x6c] sm:$0xf]
  %v235 = vld [vmem:[%s1 + $0x70] sm:$0xf]
  %v236 = vld [vmem:[%s1 + $0x74] sm:$0xf]
  %v237 = vld [vmem:[%s1 + $0x78] sm:$0xf]
  %v238 = vld [vmem:[%s1 + $0x7c] sm:$0xf]
  %v239 = vld [vmem:[%s1 + $0x80] sm:$0xf]
  %v240 = vld [vmem:[%s1 + $0x84] sm:$0xf]
  %v241 = vld [vmem:[%s1 + $0x88] sm:$0xf]
  %v242 = vld [vmem:[%s1 + $0x8c] sm:$0xf]
  %v243 = vld [vmem:[%s1 + $0x90] sm:$0xf]
  %v244 = vld [vmem:[%s1 + $0x94] sm:$0xf]
  %v245 = vld [vmem:[%s1 + $0x98] sm:$0xf]
  %v246 = vld [vmem:[%s1 + $0x9c] sm:$0xf]
  %v247 = vld [vmem:[%s1 + $0xa0] sm:$0xf]
  %v248 = vld [vmem:[%s1 + $0xa4] sm:$0xf]
  %v249 = vld [vmem:[%s1 + $0xa8] sm:$0xf]
  %v250 = vld [vmem:[%s1 + $0xac] sm:$0xf]
  %v251 = vld [vmem:[%s1 + $0xb0] sm:$0xf]
  %v252 = vld [vmem:[%s1 + $0xb4] sm:$0xf]
  %v253 = vld [vmem:[%s1 + $0xb8] sm:$0xf]
  %v254 = vld [vmem:[%s1 + $0xbc] sm:$0xf]
  %v255 = vld [vmem:[%s1 + $0xc0] sm:$0xf]
  %v256 = vld [vmem:[%s1 + $0xc4] sm:$0xf]
  %v257 = vld [vmem:[%s1 + $0xc8] sm:$0xf]
  %v258 = vld [vmem:[%s1 + $0xcc] sm:$0xf]
  %v259 = vld [vmem:[%s1 + $0xd0] sm:$0xf]
  %v260 = vld [vmem:[%s1 + $0xd4] sm:$0xf]
  %v261 = vld [vmem:[%s1 + $0xd8] sm:$0xf]
  %v262 = vld [vmem:[%s1 + $0xdc] sm:$0xf]
  %v263 = vld [vmem:[%s1 + $0xe0] sm:$0xf]
  %v264 = vld [vmem:[%s1 + $0xe4] sm:$0xf]
  %v265 = vld [vmem:[%s1 + $0xe8] sm:$0xf]
  %v266 = vld [vmem:[%s1 + $0xec] sm:$0xf]
  %v267 = vld [vmem:[%s1 + $0xf0] sm:$0xf]
  %v268 = vld [vmem:[%s1 + $0xf4] sm:$0xf]
  %v269 = vld [vmem:[%s1 + $0xf8] sm:$0xf]
  %v270 = vld [vmem:[%s1 + $0xfc] sm:$0xf]
  %v271 = vld [vmem:[%s1 + $0x100] sm:$0xf]
  %v272 = vld [vmem:[%s1 + $0x104] sm:$0xf]
  %v273 = vld [vmem:[%s1 + $0x108] sm:$0xf]
  %v274 = vld [vmem:[%s1 + $0x10c] sm:$0xf]
  %v275 = vld [vmem:[%s1 + $0x110] sm:$0xf]
  %v276 = vld [vmem:[%s1 + $0x114] sm:$0xf]
  %v277 = vld [vmem:[%s1 + $0x118] sm:$0xf]
  %v278 = vld [vmem:[%s1 + $0x11c] sm:$0xf]
  %v279 = vld [vmem:[%s2] sm:$0x1]
  %v281 = vlaneseq
  %v282 = vshrl.u32 %v281, 7
  %v283 = vsub.s32 0, %v282
  %v284 = vrot.slane %v279, %v283
  %v478 = vunpack.c.l.b16 %v15
  %v479 = vunpack.c.h.b16 %v15
  %v480 = vunpack.c.l.b16 %v16
  %v481 = vunpack.c.h.b16 %v16
  %v482 = vunpack.c.l.b16 %v17
  %v483 = vunpack.c.l.b16 %v18
  %v484 = vunpack.c.h.b16 %v18
  %v485 = vunpack.c.l.b16 %v19
  %v486 = vunpack.c.h.b16 %v19
  %v487 = vunpack.c.l.b16 %v20
  %v488 = vunpack.c.l.b16 %v21
  %v489 = vunpack.c.h.b16 %v21
  %v490 = vunpack.c.l.b16 %v22
  %v491 = vunpack.c.h.b16 %v22
  %v492 = vunpack.c.l.b16 %v23
  %v493 = vunpack.c.l.b16 %v24
  %v494 = vunpack.c.h.b16 %v24
  %v495 = vunpack.c.l.b16 %v25
  %v496 = vunpack.c.h.b16 %v25
  %v497 = vunpack.c.l.b16 %v26
  %v498 = vunpack.c.l.b16 %v27
  %v499 = vunpack.c.h.b16 %v27
  %v500 = vunpack.c.l.b16 %v28
  %v501 = vunpack.c.h.b16 %v28
  %v502 = vunpack.c.l.b16 %v29
  %v503 = vunpack.c.l.b16 %v30
  %v504 = vunpack.c.h.b16 %v30
  %v505 = vunpack.c.l.b16 %v31
  %v506 = vunpack.c.h.b16 %v31
  %v507 = vunpack.c.l.b16 %v32
  %v508 = vunpack.c.l.b16 %v33
  %v509 = vunpack.c.h.b16 %v33
  %v510 = vunpack.c.l.b16 %v34
  %v511 = vunpack.c.h.b16 %v34
  %v512 = vunpack.c.l.b16 %v35
  %v513 = vunpack.c.l.b16 %v36
  %v514 = vunpack.c.h.b16 %v36
  %v515 = vunpack.c.l.b16 %v37
  %v516 = vunpack.c.h.b16 %v37
  %v517 = vunpack.c.l.b16 %v38
  %v518 = vunpack.c.l.b16 %v39
  %v519 = vunpack.c.h.b16 %v39
  %v520 = vunpack.c.l.b16 %v40
  %v521 = vunpack.c.h.b16 %v40
  %v522 = vunpack.c.l.b16 %v41
  %v523 = vunpack.c.l.b16 %v42
  %v524 = vunpack.c.h.b16 %v42
  %v525 = vunpack.c.l.b16 %v43
  %v526 = vunpack.c.h.b16 %v43
  %v527 = vunpack.c.l.b16 %v44
  %v528 = vunpack.c.l.b16 %v45
  %v529 = vunpack.c.h.b16 %v45
  %v530 = vunpack.c.l.b16 %v46
  %v531 = vunpack.c.h.b16 %v46
  %v532 = vunpack.c.l.b16 %v47
  %v533 = vunpack.c.l.b16 %v48
  %v534 = vunpack.c.h.b16 %v48
  %v535 = vunpack.c.l.b16 %v49
  %v536 = vunpack.c.h.b16 %v49
  %v537 = vunpack.c.l.b16 %v50
  %v538 = vunpack.c.l.b16 %v51
  %v539 = vunpack.c.h.b16 %v51
  %v540 = vunpack.c.l.b16 %v52
  %v541 = vunpack.c.h.b16 %v52
  %v542 = vunpack.c.l.b16 %v53
  %v543 = vunpack.c.l.b16 %v54
  %v544 = vunpack.c.h.b16 %v54
  %v545 = vunpack.c.l.b16 %v55
  %v546 = vunpack.c.h.b16 %v55
  %v547 = vunpack.c.l.b16 %v56
  %v548 = vunpack.c.l.b16 %v57
  %v549 = vunpack.c.h.b16 %v57
  %v550 = vunpack.c.l.b16 %v58
  %v551 = vunpack.c.h.b16 %v58
  %v552 = vunpack.c.l.b16 %v59
  %v553 = vunpack.c.l.b16 %v60
  %v554 = vunpack.c.h.b16 %v60
  %v555 = vunpack.c.l.b16 %v61
  %v556 = vunpack.c.h.b16 %v61
  %v557 = vunpack.c.l.b16 %v62
  %v558 = vunpack.c.l.b16 %v63
  %v559 = vunpack.c.h.b16 %v63
  %v560 = vunpack.c.l.b16 %v64
  %v561 = vunpack.c.h.b16 %v64
  %v562 = vunpack.c.l.b16 %v65
  %v563 = vunpack.c.l.b16 %v66
  %v564 = vunpack.c.h.b16 %v66
  %v565 = vunpack.c.l.b16 %v67
  %v566 = vunpack.c.h.b16 %v67
  %v567 = vunpack.c.l.b16 %v68
  %v568 = vunpack.c.l.b16 %v69
  %v569 = vunpack.c.h.b16 %v69
  %v570 = vunpack.c.l.b16 %v70
  %v571 = vunpack.c.h.b16 %v70
  %v572 = vunpack.c.l.b16 %v71
  %v573 = vunpack.c.l.b16 %v72
  %v574 = vunpack.c.h.b16 %v72
  %v575 = vunpack.c.l.b16 %v73
  %v576 = vunpack.c.h.b16 %v73
  %v577 = vunpack.c.l.b16 %v74
  %v578 = vunpack.c.l.b16 %v75
  %v579 = vunpack.c.h.b16 %v75
  %v580 = vunpack.c.l.b16 %v76
  %v581 = vunpack.c.h.b16 %v76
  %v582 = vunpack.c.l.b16 %v77
  %v583 = vunpack.c.l.b16 %v78
  %v584 = vunpack.c.h.b16 %v78
  %v585 = vunpack.c.l.b16 %v79
  %v586 = vunpack.c.h.b16 %v79
  %v587 = vunpack.c.l.b16 %v80
  %v588 = vunpack.c.l.b16 %v81
  %v589 = vunpack.c.h.b16 %v81
  %v590 = vunpack.c.l.b16 %v82
  %v591 = vunpack.c.h.b16 %v82
  %v592 = vunpack.c.l.b16 %v83
  %v593 = vunpack.c.l.b16 %v84
  %v594 = vunpack.c.h.b16 %v84
  %v595 = vunpack.c.l.b16 %v85
  %v596 = vunpack.c.h.b16 %v85
  %v597 = vunpack.c.l.b16 %v86
  %v598 = vunpack.c.l.b16 %v87
  %v599 = vunpack.c.h.b16 %v87
  %v600 = vunpack.c.l.b16 %v88
  %v601 = vunpack.c.h.b16 %v88
  %v602 = vunpack.c.l.b16 %v89
  %v603 = vunpack.c.l.b16 %v90
  %v604 = vunpack.c.h.b16 %v90
  %v605 = vunpack.c.l.b16 %v91
  %v606 = vunpack.c.h.b16 %v91
  %v607 = vunpack.c.l.b16 %v92
  %v608 = vunpack.c.l.b16 %v93
  %v609 = vunpack.c.h.b16 %v93
  %v610 = vunpack.c.l.b16 %v94
  %v611 = vunpack.c.h.b16 %v94
  %v612 = vunpack.c.l.b16 %v95
  %v613 = vunpack.c.l.b16 %v96
  %v614 = vunpack.c.h.b16 %v96
  %v615 = vunpack.c.l.b16 %v97
  %v616 = vunpack.c.h.b16 %v97
  %v617 = vunpack.c.l.b16 %v98
  %v618 = vunpack.c.l.b16 %v99
  %v619 = vunpack.c.h.b16 %v99
  %v620 = vunpack.c.l.b16 %v100
  %v621 = vunpack.c.h.b16 %v100
  %v622 = vunpack.c.l.b16 %v101
  %v623 = vunpack.c.l.b16 %v102
  %v624 = vunpack.c.h.b16 %v102
  %v625 = vunpack.c.l.b16 %v103
  %v626 = vunpack.c.h.b16 %v103
  %v627 = vunpack.c.l.b16 %v104
  %v628 = vunpack.c.l.b16 %v105
  %v629 = vunpack.c.h.b16 %v105
  %v630 = vunpack.c.l.b16 %v106
  %v631 = vunpack.c.h.b16 %v106
  %v632 = vunpack.c.l.b16 %v107
  %v633 = vunpack.c.l.b16 %v108
  %v634 = vunpack.c.h.b16 %v108
  %v635 = vunpack.c.l.b16 %v109
  %v636 = vunpack.c.h.b16 %v109
  %v637 = vunpack.c.l.b16 %v110
  %v638 = vunpack.c.l.b16 %v111
  %v639 = vunpack.c.h.b16 %v111
  %v640 = vunpack.c.l.b16 %v112
  %v641 = vunpack.c.h.b16 %v112
  %v642 = vunpack.c.l.b16 %v113
  %v643 = vunpack.c.l.b16 %v114
  %v644 = vunpack.c.h.b16 %v114
  %v645 = vunpack.c.l.b16 %v115
  %v646 = vunpack.c.h.b16 %v115
  %v647 = vunpack.c.l.b16 %v116
  %v648 = vunpack.c.l.b16 %v117
  %v649 = vunpack.c.h.b16 %v117
  %v650 = vunpack.c.l.b16 %v118
  %v651 = vunpack.c.h.b16 %v118
  %v652 = vunpack.c.l.b16 %v119
  %v653 = vunpack.c.l.b16 %v120
  %v654 = vunpack.c.h.b16 %v120
  %v655 = vunpack.c.l.b16 %v121
  %v656 = vunpack.c.h.b16 %v121
  %v657 = vunpack.c.l.b16 %v122
  %v658 = vunpack.c.l.b16 %v123
  %v659 = vunpack.c.h.b16 %v123
  %v660 = vunpack.c.l.b16 %v124
  %v661 = vunpack.c.h.b16 %v124
  %v662 = vunpack.c.l.b16 %v125
  %v663 = vunpack.c.l.b16 %v126
  %v664 = vunpack.c.h.b16 %v126
  %v665 = vunpack.c.l.b16 %v127
  %v666 = vunpack.c.h.b16 %v127
  %v667 = vunpack.c.l.b16 %v128
  %v668 = vunpack.c.l.b16 %v129
  %v669 = vunpack.c.h.b16 %v129
  %v670 = vunpack.c.l.b16 %v130
  %v671 = vunpack.c.h.b16 %v130
  %v672 = vunpack.c.l.b16 %v131
  %v673 = vunpack.c.l.b16 %v132
  %v674 = vunpack.c.h.b16 %v132
  %v675 = vunpack.c.l.b16 %v133
  %v676 = vunpack.c.h.b16 %v133
  %v677 = vunpack.c.l.b16 %v134
  %v678 = vunpack.c.l.b16 %v135
  %v679 = vunpack.c.h.b16 %v135
  %v680 = vunpack.c.l.b16 %v136
  %v681 = vunpack.c.h.b16 %v136
  %v682 = vunpack.c.l.b16 %v137
  %v683 = vunpack.c.l.b16 %v138
  %v684 = vunpack.c.h.b16 %v138
  %v685 = vunpack.c.l.b16 %v139
  %v686 = vunpack.c.h.b16 %v139
  %v687 = vunpack.c.l.b16 %v140
  %v688 = vunpack.c.l.b16 %v141
  %v689 = vunpack.c.h.b16 %v141
  %v690 = vunpack.c.l.b16 %v142
  %v691 = vunpack.c.h.b16 %v142
  %v692 = vunpack.c.l.b16 %v143
  %v693 = vunpack.c.l.b16 %v144
  %v694 = vunpack.c.h.b16 %v144
  %v695 = vunpack.c.l.b16 %v145
  %v696 = vunpack.c.h.b16 %v145
  %v697 = vunpack.c.l.b16 %v146
  %v698 = vunpack.c.l.b16 %v147
  %v699 = vunpack.c.h.b16 %v147
  %v700 = vunpack.c.l.b16 %v148
  %v701 = vunpack.c.h.b16 %v148
  %v702 = vunpack.c.l.b16 %v149
  %v703 = vunpack.c.l.b16 %v150
  %v704 = vunpack.c.h.b16 %v150
  %v705 = vunpack.c.l.b16 %v151
  %v706 = vunpack.c.h.b16 %v151
  %v707 = vunpack.c.l.b16 %v152
  %v708 = vunpack.c.l.b16 %v153
  %v709 = vunpack.c.h.b16 %v153
  %v710 = vunpack.c.l.b16 %v154
  %v711 = vunpack.c.h.b16 %v154
  %v712 = vunpack.c.l.b16 %v155
  %v713 = vunpack.c.l.b16 %v156
  %v714 = vunpack.c.h.b16 %v156
  %v715 = vunpack.c.l.b16 %v157
  %v716 = vunpack.c.h.b16 %v157
  %v717 = vunpack.c.l.b16 %v158
  %v718 = vunpack.c.l.b16 %v159
  %v719 = vunpack.c.h.b16 %v159
  %v720 = vunpack.c.l.b16 %v160
  %v721 = vunpack.c.h.b16 %v160
  %v722 = vunpack.c.l.b16 %v161
  %v723 = vunpack.c.l.b16 %v162
  %v724 = vunpack.c.h.b16 %v162
  %v725 = vunpack.c.l.b16 %v163
  %v726 = vunpack.c.h.b16 %v163
  %v727 = vunpack.c.l.b16 %v164
  %v728 = vunpack.c.l.b16 %v165
  %v729 = vunpack.c.h.b16 %v165
  %v730 = vunpack.c.l.b16 %v166
  %v731 = vunpack.c.h.b16 %v166
  %v732 = vunpack.c.l.b16 %v167
  %v733 = vunpack.c.l.b16 %v168
  %v734 = vunpack.c.h.b16 %v168
  %v735 = vunpack.c.l.b16 %v169
  %v736 = vunpack.c.h.b16 %v169
  %v737 = vunpack.c.l.b16 %v170
  %v738 = vunpack.c.l.b16 %v171
  %v739 = vunpack.c.h.b16 %v171
  %v740 = vunpack.c.l.b16 %v172
  %v741 = vunpack.c.h.b16 %v172
  %v742 = vunpack.c.l.b16 %v173
  %v743 = vunpack.c.l.b16 %v174
  %v744 = vunpack.c.h.b16 %v174
  %v745 = vunpack.c.l.b16 %v175
  %v746 = vunpack.c.h.b16 %v175
  %v747 = vunpack.c.l.b16 %v176
  %v748 = vunpack.c.l.b16 %v177
  %v749 = vunpack.c.h.b16 %v177
  %v750 = vunpack.c.l.b16 %v178
  %v751 = vunpack.c.h.b16 %v178
  %v752 = vunpack.c.l.b16 %v179
  %v753 = vunpack.c.l.b16 %v180
  %v754 = vunpack.c.h.b16 %v180
  %v755 = vunpack.c.l.b16 %v181
  %v756 = vunpack.c.h.b16 %v181
  %v757 = vunpack.c.l.b16 %v182
  %v758 = vunpack.c.l.b16 %v183
  %v759 = vunpack.c.h.b16 %v183
  %v760 = vunpack.c.l.b16 %v184
  %v761 = vunpack.c.h.b16 %v184
  %v762 = vunpack.c.l.b16 %v185
  %v763 = vunpack.c.l.b16 %v186
  %v764 = vunpack.c.h.b16 %v186
  %v765 = vunpack.c.l.b16 %v187
  %v766 = vunpack.c.h.b16 %v187
  %v767 = vunpack.c.l.b16 %v188
  %v768 = vunpack.c.l.b16 %v189
  %v769 = vunpack.c.h.b16 %v189
  %v770 = vunpack.c.l.b16 %v190
  %v771 = vunpack.c.h.b16 %v190
  %v772 = vunpack.c.l.b16 %v191
  %v773 = vunpack.c.l.b16 %v192
  %v774 = vunpack.c.h.b16 %v192
  %v775 = vunpack.c.l.b16 %v193
  %v776 = vunpack.c.h.b16 %v193
  %v777 = vunpack.c.l.b16 %v194
  %v778 = vunpack.c.l.b16 %v195
  %v779 = vunpack.c.h.b16 %v195
  %v780 = vunpack.c.l.b16 %v196
  %v781 = vunpack.c.h.b16 %v196
  %v782 = vunpack.c.l.b16 %v197
  %v783 = vunpack.c.l.b16 %v198
  %v784 = vunpack.c.h.b16 %v198
  %v785 = vunpack.c.l.b16 %v199
  %v786 = vunpack.c.h.b16 %v199
  %v787 = vunpack.c.l.b16 %v200
  %v788 = vunpack.c.l.b16 %v201
  %v789 = vunpack.c.h.b16 %v201
  %v790 = vunpack.c.l.b16 %v202
  %v791 = vunpack.c.h.b16 %v202
  %v792 = vunpack.c.l.b16 %v203
  %v793 = vunpack.c.l.b16 %v204
  %v794 = vunpack.c.h.b16 %v204
  %v795 = vunpack.c.l.b16 %v205
  %v796 = vunpack.c.h.b16 %v205
  %v797 = vunpack.c.l.b16 %v206
  %v798 = vpack.c.b16 %v483, %v478
  %v799 = vpack.c.b16 %v484, %v479
  %v800 = vpack.c.b16 %v485, %v480
  %v801 = vpack.c.b16 %v486, %v481
  %v802 = vpack.c.b16 %v487, %v482
  %v803 = vpack.c.b16 %v493, %v488
  %v804 = vpack.c.b16 %v494, %v489
  %v805 = vpack.c.b16 %v495, %v490
  %v806 = vpack.c.b16 %v496, %v491
  %v807 = vpack.c.b16 %v497, %v492
  %v808 = vpack.c.b16 %v503, %v498
  %v809 = vpack.c.b16 %v504, %v499
  %v810 = vpack.c.b16 %v505, %v500
  %v811 = vpack.c.b16 %v506, %v501
  %v812 = vpack.c.b16 %v507, %v502
  %v813 = vpack.c.b16 %v513, %v508
  %v814 = vpack.c.b16 %v514, %v509
  %v815 = vpack.c.b16 %v515, %v510
  %v816 = vpack.c.b16 %v516, %v511
  %v817 = vpack.c.b16 %v517, %v512
  %v818 = vpack.c.b16 %v523, %v518
  %v819 = vpack.c.b16 %v524, %v519
  %v820 = vpack.c.b16 %v525, %v520
  %v821 = vpack.c.b16 %v526, %v521
  %v822 = vpack.c.b16 %v527, %v522
  %v823 = vpack.c.b16 %v533, %v528
  %v824 = vpack.c.b16 %v534, %v529
  %v825 = vpack.c.b16 %v535, %v530
  %v826 = vpack.c.b16 %v536, %v531
  %v827 = vpack.c.b16 %v537, %v532
  %v828 = vpack.c.b16 %v543, %v538
  %v829 = vpack.c.b16 %v544, %v539
  %v830 = vpack.c.b16 %v545, %v540
  %v831 = vpack.c.b16 %v546, %v541
  %v832 = vpack.c.b16 %v547, %v542
  %v833 = vpack.c.b16 %v553, %v548
  %v834 = vpack.c.b16 %v554, %v549
  %v835 = vpack.c.b16 %v555, %v550
  %v836 = vpack.c.b16 %v556, %v551
  %v837 = vpack.c.b16 %v557, %v552
  %v838 = vpack.c.b16 %v563, %v558
  %v839 = vpack.c.b16 %v564, %v559
  %v840 = vpack.c.b16 %v565, %v560
  %v841 = vpack.c.b16 %v566, %v561
  %v842 = vpack.c.b16 %v567, %v562
  %v843 = vpack.c.b16 %v573, %v568
  %v844 = vpack.c.b16 %v574, %v569
  %v845 = vpack.c.b16 %v575, %v570
  %v846 = vpack.c.b16 %v576, %v571
  %v847 = vpack.c.b16 %v577, %v572
  %v848 = vpack.c.b16 %v583, %v578
  %v849 = vpack.c.b16 %v584, %v579
  %v850 = vpack.c.b16 %v585, %v580
  %v851 = vpack.c.b16 %v586, %v581
  %v852 = vpack.c.b16 %v587, %v582
  %v853 = vpack.c.b16 %v593, %v588
  %v854 = vpack.c.b16 %v594, %v589
  %v855 = vpack.c.b16 %v595, %v590
  %v856 = vpack.c.b16 %v596, %v591
  %v857 = vpack.c.b16 %v597, %v592
  %v858 = vpack.c.b16 %v603, %v598
  %v859 = vpack.c.b16 %v604, %v599
  %v860 = vpack.c.b16 %v605, %v600
  %v861 = vpack.c.b16 %v606, %v601
  %v862 = vpack.c.b16 %v607, %v602
  %v863 = vpack.c.b16 %v613, %v608
  %v864 = vpack.c.b16 %v614, %v609
  %v865 = vpack.c.b16 %v615, %v610
  %v866 = vpack.c.b16 %v616, %v611
  %v867 = vpack.c.b16 %v617, %v612
  %v868 = vpack.c.b16 %v623, %v618
  %v869 = vpack.c.b16 %v624, %v619
  %v870 = vpack.c.b16 %v625, %v620
  %v871 = vpack.c.b16 %v626, %v621
  %v872 = vpack.c.b16 %v627, %v622
  %v873 = vpack.c.b16 %v633, %v628
  %v874 = vpack.c.b16 %v634, %v629
  %v875 = vpack.c.b16 %v635, %v630
  %v876 = vpack.c.b16 %v636, %v631
  %v877 = vpack.c.b16 %v637, %v632
  %v878 = vpack.c.b16 %v643, %v638
  %v879 = vpack.c.b16 %v644, %v639
  %v880 = vpack.c.b16 %v645, %v640
  %v881 = vpack.c.b16 %v646, %v641
  %v882 = vpack.c.b16 %v647, %v642
  %v883 = vpack.c.b16 %v653, %v648
  %v884 = vpack.c.b16 %v654, %v649
  %v885 = vpack.c.b16 %v655, %v650
  %v886 = vpack.c.b16 %v656, %v651
  %v887 = vpack.c.b16 %v657, %v652
  %v888 = vpack.c.b16 %v663, %v658
  %v889 = vpack.c.b16 %v664, %v659
  %v890 = vpack.c.b16 %v665, %v660
  %v891 = vpack.c.b16 %v666, %v661
  %v892 = vpack.c.b16 %v667, %v662
  %v893 = vpack.c.b16 %v673, %v668
  %v894 = vpack.c.b16 %v674, %v669
  %v895 = vpack.c.b16 %v675, %v670
  %v896 = vpack.c.b16 %v676, %v671
  %v897 = vpack.c.b16 %v677, %v672
  %v898 = vpack.c.b16 %v683, %v678
  %v899 = vpack.c.b16 %v684, %v679
  %v900 = vpack.c.b16 %v685, %v680
  %v901 = vpack.c.b16 %v686, %v681
  %v902 = vpack.c.b16 %v687, %v682
  %v903 = vpack.c.b16 %v693, %v688
  %v904 = vpack.c.b16 %v694, %v689
  %v905 = vpack.c.b16 %v695, %v690
  %v906 = vpack.c.b16 %v696, %v691
  %v907 = vpack.c.b16 %v697, %v692
  %v908 = vpack.c.b16 %v703, %v698
  %v909 = vpack.c.b16 %v704, %v699
  %v910 = vpack.c.b16 %v705, %v700
  %v911 = vpack.c.b16 %v706, %v701
  %v912 = vpack.c.b16 %v707, %v702
  %v913 = vpack.c.b16 %v713, %v708
  %v914 = vpack.c.b16 %v714, %v709
  %v915 = vpack.c.b16 %v715, %v710
  %v916 = vpack.c.b16 %v716, %v711
  %v917 = vpack.c.b16 %v717, %v712
  %v918 = vpack.c.b16 %v723, %v718
  %v919 = vpack.c.b16 %v724, %v719
  %v920 = vpack.c.b16 %v725, %v720
  %v921 = vpack.c.b16 %v726, %v721
  %v922 = vpack.c.b16 %v727, %v722
  %v923 = vpack.c.b16 %v733, %v728
  %v924 = vpack.c.b16 %v734, %v729
  %v925 = vpack.c.b16 %v735, %v730
  %v926 = vpack.c.b16 %v736, %v731
  %v927 = vpack.c.b16 %v737, %v732
  %v928 = vpack.c.b16 %v743, %v738
  %v929 = vpack.c.b16 %v744, %v739
  %v930 = vpack.c.b16 %v745, %v740
  %v931 = vpack.c.b16 %v746, %v741
  %v932 = vpack.c.b16 %v747, %v742
  %v933 = vpack.c.b16 %v753, %v748
  %v934 = vpack.c.b16 %v754, %v749
  %v935 = vpack.c.b16 %v755, %v750
  %v936 = vpack.c.b16 %v756, %v751
  %v937 = vpack.c.b16 %v757, %v752
  %v938 = vpack.c.b16 %v763, %v758
  %v939 = vpack.c.b16 %v764, %v759
  %v940 = vpack.c.b16 %v765, %v760
  %v941 = vpack.c.b16 %v766, %v761
  %v942 = vpack.c.b16 %v767, %v762
  %v943 = vpack.c.b16 %v773, %v768
  %v944 = vpack.c.b16 %v774, %v769
  %v945 = vpack.c.b16 %v775, %v770
  %v946 = vpack.c.b16 %v776, %v771
  %v947 = vpack.c.b16 %v777, %v772
  %v948 = vpack.c.b16 %v783, %v778
  %v949 = vpack.c.b16 %v784, %v779
  %v950 = vpack.c.b16 %v785, %v780
  %v951 = vpack.c.b16 %v786, %v781
  %v952 = vpack.c.b16 %v787, %v782
  %v953 = vpack.c.b16 %v793, %v788
  %v954 = vpack.c.b16 %v794, %v789
  %v955 = vpack.c.b16 %v795, %v790
  %v956 = vpack.c.b16 %v796, %v791
  %v957 = vpack.c.b16 %v797, %v792
  %v1158 = vunpack.c.l.b16 %v207
  %v1159 = vunpack.c.l.b16 %v208
  %v1160 = vunpack.c.l.b16 %v209
  %v1161 = vunpack.c.l.b16 %v210
  %v1162 = vunpack.c.l.b16 %v211
  %v1163 = vunpack.c.l.b16 %v212
  %v1164 = vunpack.c.l.b16 %v213
  %v1165 = vunpack.c.l.b16 %v214
  %v1166 = vunpack.c.l.b16 %v215
  %v1167 = vunpack.c.l.b16 %v216
  %v1168 = vunpack.c.l.b16 %v217
  %v1169 = vunpack.c.l.b16 %v218
  %v1170 = vunpack.c.l.b16 %v219
  %v1171 = vunpack.c.l.b16 %v220
  %v1172 = vunpack.c.l.b16 %v221
  %v1173 = vunpack.c.l.b16 %v222
  %v1174 = vunpack.c.l.b16 %v223
  %v1175 = vunpack.c.l.b16 %v224
  %v1176 = vunpack.c.l.b16 %v225
  %v1177 = vunpack.c.l.b16 %v226
  %v1178 = vunpack.c.l.b16 %v227
  %v1179 = vunpack.c.l.b16 %v228
  %v1180 = vunpack.c.l.b16 %v229
  %v1181 = vunpack.c.l.b16 %v230
  %v1182 = vunpack.c.l.b16 %v231
  %v1183 = vunpack.c.l.b16 %v232
  %v1184 = vunpack.c.l.b16 %v233
  %v1185 = vunpack.c.l.b16 %v234
  %v1186 = vunpack.c.l.b16 %v235
  %v1187 = vunpack.c.l.b16 %v236
  %v1188 = vunpack.c.l.b16 %v237
  %v1189 = vunpack.c.l.b16 %v238
  %v1190 = vunpack.c.l.b16 %v239
  %v1191 = vunpack.c.l.b16 %v240
  %v1192 = vunpack.c.l.b16 %v241
  %v1193 = vunpack.c.l.b16 %v242
  %v1194 = vunpack.c.l.b16 %v243
  %v1195 = vunpack.c.l.b16 %v244
  %v1196 = vunpack.c.l.b16 %v245
  %v1197 = vunpack.c.l.b16 %v246
  %v1198 = vunpack.c.l.b16 %v247
  %v1199 = vunpack.c.l.b16 %v248
  %v1200 = vunpack.c.l.b16 %v249
  %v1201 = vunpack.c.l.b16 %v250
  %v1202 = vunpack.c.l.b16 %v251
  %v1203 = vunpack.c.l.b16 %v252
  %v1204 = vunpack.c.l.b16 %v253
  %v1205 = vunpack.c.l.b16 %v254
  %v1206 = vunpack.c.l.b16 %v255
  %v1207 = vunpack.c.l.b16 %v256
  %v1208 = vunpack.c.l.b16 %v257
  %v1209 = vunpack.c.l.b16 %v258
  %v1210 = vunpack.c.l.b16 %v259
  %v1211 = vunpack.c.l.b16 %v260
  %v1212 = vunpack.c.l.b16 %v261
  %v1213 = vunpack.c.l.b16 %v262
  %v1214 = vunpack.c.l.b16 %v263
  %v1215 = vunpack.c.l.b16 %v264
  %v1216 = vunpack.c.l.b16 %v265
  %v1217 = vunpack.c.l.b16 %v266
  %v1218 = vunpack.c.l.b16 %v267
  %v1219 = vunpack.c.l.b16 %v268
  %v1220 = vunpack.c.l.b16 %v269
  %v1221 = vunpack.c.l.b16 %v270
  %v1222 = vunpack.c.l.b16 %v271
  %v1223 = vunpack.c.l.b16 %v272
  %v1224 = vunpack.c.l.b16 %v273
  %v1225 = vunpack.c.l.b16 %v274
  %v1226 = vunpack.c.l.b16 %v275
  %v1227 = vunpack.c.l.b16 %v276
  %v1228 = vunpack.c.l.b16 %v277
  %v1229 = vunpack.c.l.b16 %v278
  %v1230 = vpack.c.b16 %v1159, %v1158
  %v1231 = vpack.c.b16 %v1161, %v1160
  %v1232 = vpack.c.b16 %v1163, %v1162
  %v1233 = vpack.c.b16 %v1165, %v1164
  %v1234 = vpack.c.b16 %v1167, %v1166
  %v1235 = vpack.c.b16 %v1169, %v1168
  %v1236 = vpack.c.b16 %v1171, %v1170
  %v1237 = vpack.c.b16 %v1173, %v1172
  %v1238 = vpack.c.b16 %v1175, %v1174
  %v1239 = vpack.c.b16 %v1177, %v1176
  %v1240 = vpack.c.b16 %v1179, %v1178
  %v1241 = vpack.c.b16 %v1181, %v1180
  %v1242 = vpack.c.b16 %v1183, %v1182
  %v1243 = vpack.c.b16 %v1185, %v1184
  %v1244 = vpack.c.b16 %v1187, %v1186
  %v1245 = vpack.c.b16 %v1189, %v1188
  %v1246 = vpack.c.b16 %v1191, %v1190
  %v1247 = vpack.c.b16 %v1193, %v1192
  %v1248 = vpack.c.b16 %v1195, %v1194
  %v1249 = vpack.c.b16 %v1197, %v1196
  %v1250 = vpack.c.b16 %v1199, %v1198
  %v1251 = vpack.c.b16 %v1201, %v1200
  %v1252 = vpack.c.b16 %v1203, %v1202
  %v1253 = vpack.c.b16 %v1205, %v1204
  %v1254 = vpack.c.b16 %v1207, %v1206
  %v1255 = vpack.c.b16 %v1209, %v1208
  %v1256 = vpack.c.b16 %v1211, %v1210
  %v1257 = vpack.c.b16 %v1213, %v1212
  %v1258 = vpack.c.b16 %v1215, %v1214
  %v1259 = vpack.c.b16 %v1217, %v1216
  %v1260 = vpack.c.b16 %v1219, %v1218
  %v1261 = vpack.c.b16 %v1221, %v1220
  %v1262 = vpack.c.b16 %v1223, %v1222
  %v1263 = vpack.c.b16 %v1225, %v1224
  %v1264 = vpack.c.b16 %v1227, %v1226
  %v1265 = vpack.c.b16 %v1229, %v1228
  %vm1302 = vcmask 523264
  %v1304 = vsel %vm1302, %v802, 0
  %v1307 = vsel %vm1302, %v807, 0
  %v1310 = vsel %vm1302, %v812, 0
  %v1313 = vsel %vm1302, %v817, 0
  %v1316 = vsel %vm1302, %v822, 0
  %v1319 = vsel %vm1302, %v827, 0
  %v1322 = vsel %vm1302, %v832, 0
  %v1325 = vsel %vm1302, %v837, 0
  %v1328 = vsel %vm1302, %v842, 0
  %v1331 = vsel %vm1302, %v847, 0
  %v1334 = vsel %vm1302, %v852, 0
  %v1337 = vsel %vm1302, %v857, 0
  %v1340 = vsel %vm1302, %v862, 0
  %v1343 = vsel %vm1302, %v867, 0
  %v1346 = vsel %vm1302, %v872, 0
  %v1349 = vsel %vm1302, %v877, 0
  %v1352 = vsel %vm1302, %v882, 0
  %v1355 = vsel %vm1302, %v887, 0
  %v1358 = vsel %vm1302, %v892, 0
  %v1361 = vsel %vm1302, %v897, 0
  %v1364 = vsel %vm1302, %v902, 0
  %v1367 = vsel %vm1302, %v907, 0
  %v1370 = vsel %vm1302, %v912, 0
  %v1373 = vsel %vm1302, %v917, 0
  %v1376 = vsel %vm1302, %v922, 0
  %v1379 = vsel %vm1302, %v927, 0
  %v1382 = vsel %vm1302, %v932, 0
  %v1385 = vsel %vm1302, %v937, 0
  %v1388 = vsel %vm1302, %v942, 0
  %v1391 = vsel %vm1302, %v947, 0
  %v1394 = vsel %vm1302, %v952, 0
  %v1397 = vsel %vm1302, %v957, 0
  %1399 = vmatprep.subr.bf16.mxu0 0
  %1400 = vmatpush1.bf16.msra.mxu0 %v1230
  %1401 = vmatprep.subr.bf16.mxu0 0
  %1402 = vmatpush1.bf16.msra.mxu0 %v1231
  %1403 = vmatprep.subr.bf16.mxu0 0
  %1404 = vmatpush1.bf16.msra.mxu0 %v1232
  %1405 = vmatprep.subr.bf16.mxu0 0
  %1406 = vmatpush1.bf16.msra.mxu0 %v1233
  %1407 = vmatprep.subr.bf16.mxu0 0
  %1408 = vmatpush1.bf16.msra.mxu0 %v1234
  %1409 = vmatprep.subr.bf16.mxu0 0
  %1410 = vmatpush1.bf16.msra.mxu0 %v1235
  %1411 = vmatprep.subr.bf16.mxu0 0
  %1412 = vmatpush1.bf16.msra.mxu0 %v1236
  %1413 = vmatprep.subr.bf16.mxu0 0
  %1414 = vmatpush1.bf16.msra.mxu0 %v1237
  %1415 = vmatprep.subr.bf16.mxu0 0
  %1416 = vmatpush1.bf16.msra.mxu0 %v1238
  %1417 = vmatprep.subr.bf16.mxu0 0
  %1418 = vmatpush1.bf16.msra.mxu0 %v1239
  %1419 = vmatprep.subr.bf16.mxu0 0
  %1420 = vmatpush1.bf16.msra.mxu0 %v1240
  %1421 = vmatprep.subr.bf16.mxu0 0
  %1422 = vmatpush1.bf16.msra.mxu0 %v1241
  %1423 = vmatprep.subr.bf16.mxu0 0
  %1424 = vmatpush1.bf16.msra.mxu0 %v1242
  %1425 = vmatprep.subr.bf16.mxu0 0
  %1426 = vmatpush1.bf16.msra.mxu0 %v1243
  %1427 = vmatprep.subr.bf16.mxu0 0
  %1428 = vmatpush1.bf16.msra.mxu0 %v1244
  %1429 = vmatprep.subr.bf16.mxu0 0
  %1430 = vmatpush1.bf16.msra.mxu0 %v1245
  %1431 = vmatprep.mubr.bf16.mxu0 %v799
  %1432 = vmatmul.mubr.bf16.gmra.mrb[0].mxu0 %v798
  %v1433 = vpop.f32.mrb[0].mxu0
  %v1434 = vadd.f32 %v284, %v1433
  %v1435 = vpop.f32.mrb[0].mxu0
  %v1436 = vpop.f32.mrb[0].mxu0
  %v1437 = vadd.f32 %v284, %v1436
  %v1438 = vpop.f32.mrb[0].mxu0
  %1439 = vmatprep.mubr.bf16.mxu0 %v804
  %1440 = vmatmul.mubr.bf16.gmra.mrb[0].mxu0 %v803
  %v1441 = vpop.f32.mrb[0].mxu0
  %v1442 = vadd.f32 %v284, %v1441
  %v1443 = vpop.f32.mrb[0].mxu0
  %v1444 = vpop.f32.mrb[0].mxu0
  %v1445 = vadd.f32 %v284, %v1444
  %v1446 = vpop.f32.mrb[0].mxu0
  %1447 = vmatprep.mubr.bf16.mxu0 %v809
  %1448 = vmatmul.mubr.bf16.gmra.mrb[0].mxu0 %v808
  %v1449 = vpop.f32.mrb[0].mxu0
  %v1450 = vadd.f32 %v284, %v1449
  %v1451 = vpop.f32.mrb[0].mxu0
  %v1452 = vpop.f32.mrb[0].mxu0
  %v1453 = vadd.f32 %v284, %v1452
  %v1454 = vpop.f32.mrb[0].mxu0
  %1455 = vmatprep.mubr.bf16.mxu0 %v814
  %1456 = vmatmul.mubr.bf16.gmra.mrb[0].mxu0 %v813
  %v1457 = vpop.f32.mrb[0].mxu0
  %v1458 = vadd.f32 %v284, %v1457
  %v1459 = vpop.f32.mrb[0].mxu0
  %v1460 = vpop.f32.mrb[0].mxu0
  %v1461 = vadd.f32 %v284, %v1460
  %v1462 = vpop.f32.mrb[0].mxu0
  %1463 = vmatprep.mubr.bf16.mxu0 %v819
  %1464 = vmatmul.mubr.bf16.gmra.mrb[0].mxu0 %v818
  %v1465 = vpop.f32.mrb[0].mxu0
  %v1466 = vadd.f32 %v284, %v1465
  %v1467 = vpop.f32.mrb[0].mxu0
  %v1468 = vpop.f32.mrb[0].mxu0
  %v1469 = vadd.f32 %v284, %v1468
  %v1470 = vpop.f32.mrb[0].mxu0
  %1471 = vmatprep.mubr.bf16.mxu0 %v824
  %1472 = vmatmul.mubr.bf16.gmra.mrb[0].mxu0 %v823
  %v1473 = vpop.f32.mrb[0].mxu0
  %v1474 = vadd.f32 %v284, %v1473
  %v1475 = vpop.f32.mrb[0].mxu0
  %v1476 = vpop.f32.mrb[0].mxu0
  %v1477 = vadd.f32 %v284, %v1476
  %v1478 = vpop.f32.mrb[0].mxu0
  %1479 = vmatprep.mubr.bf16.mxu0 %v829
  %1480 = vmatmul.mubr.bf16.gmra.mrb[0].mxu0 %v828
  %v1481 = vpop.f32.mrb[0].mxu0
  %v1482 = vadd.f32 %v284, %v1481
  %v1483 = vpop.f32.mrb[0].mxu0
  %v1484 = vpop.f32.mrb[0].mxu0
  %v1485 = vadd.f32 %v284, %v1484
  %v1486 = vpop.f32.mrb[0].mxu0
  %1487 = vmatprep.mubr.bf16.mxu0 %v834
  %1488 = vmatmul.mubr.bf16.gmra.mrb[0].mxu0 %v833
  %v1489 = vpop.f32.mrb[0].mxu0
  %v1490 = vadd.f32 %v284, %v1489
  %v1491 = vpop.f32.mrb[0].mxu0
  %v1492 = vpop.f32.mrb[0].mxu0
  %v1493 = vadd.f32 %v284, %v1492
  %v1494 = vpop.f32.mrb[0].mxu0
  %1495 = vmatprep.mubr.bf16.mxu0 %v839
  %1496 = vmatmul.mubr.bf16.gmra.mrb[0].mxu0 %v838
  %v1497 = vpop.f32.mrb[0].mxu0
  %v1498 = vadd.f32 %v284, %v1497
  %v1499 = vpop.f32.mrb[0].mxu0
  %v1500 = vpop.f32.mrb[0].mxu0
  %v1501 = vadd.f32 %v284, %v1500
  %v1502 = vpop.f32.mrb[0].mxu0
  %1503 = vmatprep.mubr.bf16.mxu0 %v844
  %1504 = vmatmul.mubr.bf16.gmra.mrb[0].mxu0 %v843
  %v1505 = vpop.f32.mrb[0].mxu0
  %v1506 = vadd.f32 %v284, %v1505
  %v1507 = vpop.f32.mrb[0].mxu0
  %v1508 = vpop.f32.mrb[0].mxu0
  %v1509 = vadd.f32 %v284, %v1508
  %v1510 = vpop.f32.mrb[0].mxu0
  %1511 = vmatprep.mubr.bf16.mxu0 %v849
  %1512 = vmatmul.mubr.bf16.gmra.mrb[0].mxu0 %v848
  %v1513 = vpop.f32.mrb[0].mxu0
  %v1514 = vadd.f32 %v284, %v1513
  %v1515 = vpop.f32.mrb[0].mxu0
  %v1516 = vpop.f32.mrb[0].mxu0
  %v1517 = vadd.f32 %v284, %v1516
  %v1518 = vpop.f32.mrb[0].mxu0
  %1519 = vmatprep.mubr.bf16.mxu0 %v854
  %1520 = vmatmul.mubr.bf16.gmra.mrb[0].mxu0 %v853
  %v1521 = vpop.f32.mrb[0].mxu0
  %v1522 = vadd.f32 %v284, %v1521
  %v1523 = vpop.f32.mrb[0].mxu0
  %v1524 = vpop.f32.mrb[0].mxu0
  %v1525 = vadd.f32 %v284, %v1524
  %v1526 = vpop.f32.mrb[0].mxu0
  %1527 = vmatprep.mubr.bf16.mxu0 %v859
  %1528 = vmatmul.mubr.bf16.gmra.mrb[0].mxu0 %v858
  %v1529 = vpop.f32.mrb[0].mxu0
  %v1530 = vadd.f32 %v284, %v1529
  %v1531 = vpop.f32.mrb[0].mxu0
  %v1532 = vpop.f32.mrb[0].mxu0
  %v1533 = vadd.f32 %v284, %v1532
  %v1534 = vpop.f32.mrb[0].mxu0
  %1535 = vmatprep.mubr.bf16.mxu0 %v864
  %1536 = vmatmul.mubr.bf16.gmra.mrb[0].mxu0 %v863
  %v1537 = vpop.f32.mrb[0].mxu0
  %v1538 = vadd.f32 %v284, %v1537
  %v1539 = vpop.f32.mrb[0].mxu0
  %v1540 = vpop.f32.mrb[0].mxu0
  %v1541 = vadd.f32 %v284, %v1540
  %v1542 = vpop.f32.mrb[0].mxu0
  %1543 = vmatprep.mubr.bf16.mxu0 %v869
  %1544 = vmatmul.mubr.bf16.gmra.mrb[0].mxu0 %v868
  %v1545 = vpop.f32.mrb[0].mxu0
  %v1546 = vadd.f32 %v284, %v1545
  %v1547 = vpop.f32.mrb[0].mxu0
  %v1548 = vpop.f32.mrb[0].mxu0
  %v1549 = vadd.f32 %v284, %v1548
  %v1550 = vpop.f32.mrb[0].mxu0
  %1551 = vmatprep.mubr.bf16.mxu0 %v874
  %1552 = vmatmul.mubr.bf16.gmra.mrb[0].mxu0 %v873
  %v1553 = vpop.f32.mrb[0].mxu0
  %v1554 = vadd.f32 %v284, %v1553
  %v1555 = vpop.f32.mrb[0].mxu0
  %v1556 = vpop.f32.mrb[0].mxu0
  %v1557 = vadd.f32 %v284, %v1556
  %v1558 = vpop.f32.mrb[0].mxu0
  %1559 = vmatprep.mubr.bf16.mxu0 %v879
  %1560 = vmatmul.mubr.bf16.gmra.mrb[0].mxu0 %v878
  %v1561 = vpop.f32.mrb[0].mxu0
  %v1562 = vadd.f32 %v284, %v1561
  %v1563 = vpop.f32.mrb[0].mxu0
  %v1564 = vpop.f32.mrb[0].mxu0
  %v1565 = vadd.f32 %v284, %v1564
  %v1566 = vpop.f32.mrb[0].mxu0
  %1567 = vmatprep.mubr.bf16.mxu0 %v884
  %1568 = vmatmul.mubr.bf16.gmra.mrb[0].mxu0 %v883
  %v1569 = vpop.f32.mrb[0].mxu0
  %v1570 = vadd.f32 %v284, %v1569
  %v1571 = vpop.f32.mrb[0].mxu0
  %v1572 = vpop.f32.mrb[0].mxu0
  %v1573 = vadd.f32 %v284, %v1572
  %v1574 = vpop.f32.mrb[0].mxu0
  %1575 = vmatprep.mubr.bf16.mxu0 %v889
  %1576 = vmatmul.mubr.bf16.gmra.mrb[0].mxu0 %v888
  %v1577 = vpop.f32.mrb[0].mxu0
  %v1578 = vadd.f32 %v284, %v1577
  %v1579 = vpop.f32.mrb[0].mxu0
  %v1580 = vpop.f32.mrb[0].mxu0
  %v1581 = vadd.f32 %v284, %v1580
  %v1582 = vpop.f32.mrb[0].mxu0
  %1583 = vmatprep.mubr.bf16.mxu0 %v894
  %1584 = vmatmul.mubr.bf16.gmra.mrb[0].mxu0 %v893
  %v1585 = vpop.f32.mrb[0].mxu0
  %v1586 = vadd.f32 %v284, %v1585
  %v1587 = vpop.f32.mrb[0].mxu0
  %v1588 = vpop.f32.mrb[0].mxu0
  %v1589 = vadd.f32 %v284, %v1588
  %v1590 = vpop.f32.mrb[0].mxu0
  %1591 = vmatprep.mubr.bf16.mxu0 %v899
  %1592 = vmatmul.mubr.bf16.gmra.mrb[0].mxu0 %v898
  %v1593 = vpop.f32.mrb[0].mxu0
  %v1594 = vadd.f32 %v284, %v1593
  %v1595 = vpop.f32.mrb[0].mxu0
  %v1596 = vpop.f32.mrb[0].mxu0
  %v1597 = vadd.f32 %v284, %v1596
  %v1598 = vpop.f32.mrb[0].mxu0
  %1599 = vmatprep.mubr.bf16.mxu0 %v904
  %1600 = vmatmul.mubr.bf16.gmra.mrb[0].mxu0 %v903
  %v1601 = vpop.f32.mrb[0].mxu0
  %v1602 = vadd.f32 %v284, %v1601
  %v1603 = vpop.f32.mrb[0].mxu0
  %v1604 = vpop.f32.mrb[0].mxu0
  %v1605 = vadd.f32 %v284, %v1604
  %v1606 = vpop.f32.mrb[0].mxu0
  %1607 = vmatprep.mubr.bf16.mxu0 %v909
  %1608 = vmatmul.mubr.bf16.gmra.mrb[0].mxu0 %v908
  %v1609 = vpop.f32.mrb[0].mxu0
  %v1610 = vadd.f32 %v284, %v1609
  %v1611 = vpop.f32.mrb[0].mxu0
  %v1612 = vpop.f32.mrb[0].mxu0
  %v1613 = vadd.f32 %v284, %v1612
  %v1614 = vpop.f32.mrb[0].mxu0
  %1615 = vmatprep.mubr.bf16.mxu0 %v914
  %1616 = vmatmul.mubr.bf16.gmra.mrb[0].mxu0 %v913
  %v1617 = vpop.f32.mrb[0].mxu0
  %v1618 = vadd.f32 %v284, %v1617
  %v1619 = vpop.f32.mrb[0].mxu0
  %v1620 = vpop.f32.mrb[0].mxu0
  %v1621 = vadd.f32 %v284, %v1620
  %v1622 = vpop.f32.mrb[0].mxu0
  %1623 = vmatprep.mubr.bf16.mxu0 %v919
  %1624 = vmatmul.mubr.bf16.gmra.mrb[0].mxu0 %v918
  %v1625 = vpop.f32.mrb[0].mxu0
  %v1626 = vadd.f32 %v284, %v1625
  %v1627 = vpop.f32.mrb[0].mxu0
  %v1628 = vpop.f32.mrb[0].mxu0
  %v1629 = vadd.f32 %v284, %v1628
  %v1630 = vpop.f32.mrb[0].mxu0
  %1631 = vmatprep.mubr.bf16.mxu0 %v924
  %1632 = vmatmul.mubr.bf16.gmra.mrb[0].mxu0 %v923
  %v1633 = vpop.f32.mrb[0].mxu0
  %v1634 = vadd.f32 %v284, %v1633
  %v1635 = vpop.f32.mrb[0].mxu0
  %v1636 = vpop.f32.mrb[0].mxu0
  %v1637 = vadd.f32 %v284, %v1636
  %v1638 = vpop.f32.mrb[0].mxu0
  %1639 = vmatprep.mubr.bf16.mxu0 %v929
  %1640 = vmatmul.mubr.bf16.gmra.mrb[0].mxu0 %v928
  %v1641 = vpop.f32.mrb[0].mxu0
  %v1642 = vadd.f32 %v284, %v1641
  %v1643 = vpop.f32.mrb[0].mxu0
  %v1644 = vpop.f32.mrb[0].mxu0
  %v1645 = vadd.f32 %v284, %v1644
  %v1646 = vpop.f32.mrb[0].mxu0
  %1647 = vmatprep.mubr.bf16.mxu0 %v934
  %1648 = vmatmul.mubr.bf16.gmra.mrb[0].mxu0 %v933
  %v1649 = vpop.f32.mrb[0].mxu0
  %v1650 = vadd.f32 %v284, %v1649
  %v1651 = vpop.f32.mrb[0].mxu0
  %v1652 = vpop.f32.mrb[0].mxu0
  %v1653 = vadd.f32 %v284, %v1652
  %v1654 = vpop.f32.mrb[0].mxu0
  %1655 = vmatprep.mubr.bf16.mxu0 %v939
  %1656 = vmatmul.mubr.bf16.gmra.mrb[0].mxu0 %v938
  %v1657 = vpop.f32.mrb[0].mxu0
  %v1658 = vadd.f32 %v284, %v1657
  %v1659 = vpop.f32.mrb[0].mxu0
  %v1660 = vpop.f32.mrb[0].mxu0
  %v1661 = vadd.f32 %v284, %v1660
  %v1662 = vpop.f32.mrb[0].mxu0
  %1663 = vmatprep.mubr.bf16.mxu0 %v944
  %1664 = vmatmul.mubr.bf16.gmra.mrb[0].mxu0 %v943
  %v1665 = vpop.f32.mrb[0].mxu0
  %v1666 = vadd.f32 %v284, %v1665
  %v1667 = vpop.f32.mrb[0].mxu0
  %v1668 = vpop.f32.mrb[0].mxu0
  %v1669 = vadd.f32 %v284, %v1668
  %v1670 = vpop.f32.mrb[0].mxu0
  %1671 = vmatprep.mubr.bf16.mxu0 %v949
  %1672 = vmatmul.mubr.bf16.gmra.mrb[0].mxu0 %v948
  %v1673 = vpop.f32.mrb[0].mxu0
  %v1674 = vadd.f32 %v284, %v1673
  %v1675 = vpop.f32.mrb[0].mxu0
  %v1676 = vpop.f32.mrb[0].mxu0
  %v1677 = vadd.f32 %v284, %v1676
  %v1678 = vpop.f32.mrb[0].mxu0
  %1679 = vmatprep.mubr.bf16.mxu0 %v954
  %1680 = vmatmul.mubr.bf16.gmra.mrb[0].mxu0 %v953
  %v1681 = vpop.f32.mrb[0].mxu0
  %v1682 = vadd.f32 %v284, %v1681
  %v1683 = vpop.f32.mrb[0].mxu0
  %v1684 = vpop.f32.mrb[0].mxu0
  %v1685 = vadd.f32 %v284, %v1684
  %v1686 = vpop.f32.mrb[0].mxu0
  %1687 = vdwg.mxu0
  %1688 = vmatprep.subr.bf16.mxu0 0
  %1689 = vmatpush1.bf16.msra.mxu0 %v1246
  %1690 = vmatprep.subr.bf16.mxu0 0
  %1691 = vmatpush1.bf16.msra.mxu0 %v1247
  %1692 = vmatprep.subr.bf16.mxu0 0
  %1693 = vmatpush1.bf16.msra.mxu0 %v1248
  %1694 = vmatprep.subr.bf16.mxu0 0
  %1695 = vmatpush1.bf16.msra.mxu0 %v1249
  %1696 = vmatprep.subr.bf16.mxu0 0
  %1697 = vmatpush1.bf16.msra.mxu0 %v1250
  %1698 = vmatprep.subr.bf16.mxu0 0
  %1699 = vmatpush1.bf16.msra.mxu0 %v1251
  %1700 = vmatprep.subr.bf16.mxu0 0
  %1701 = vmatpush1.bf16.msra.mxu0 %v1252
  %1702 = vmatprep.subr.bf16.mxu0 0
  %1703 = vmatpush1.bf16.msra.mxu0 %v1253
  %1704 = vmatprep.subr.bf16.mxu0 0
  %1705 = vmatpush1.bf16.msra.mxu0 %v1254
  %1706 = vmatprep.subr.bf16.mxu0 0
  %1707 = vmatpush1.bf16.msra.mxu0 %v1255
  %1708 = vmatprep.subr.bf16.mxu0 0
  %1709 = vmatpush1.bf16.msra.mxu0 %v1256
  %1710 = vmatprep.subr.bf16.mxu0 0
  %1711 = vmatpush1.bf16.msra.mxu0 %v1257
  %1712 = vmatprep.subr.bf16.mxu0 0
  %1713 = vmatpush1.bf16.msra.mxu0 %v1258
  %1714 = vmatprep.subr.bf16.mxu0 0
  %1715 = vmatpush1.bf16.msra.mxu0 %v1259
  %1716 = vmatprep.subr.bf16.mxu0 0
  %1717 = vmatpush1.bf16.msra.mxu0 %v1260
  %1718 = vmatprep.subr.bf16.mxu0 0
  %1719 = vmatpush1.bf16.msra.mxu0 %v1261
  %1720 = vmatprep.mubr.bf16.mxu0 %v801
  %1721 = vmatmul.mubr.bf16.gmra.mrb[0].mxu0 %v800
  %v1722 = vpop.f32.mrb[0].mxu0
  %v1723 = vadd.f32 %v1434, %v1722
  %v1724 = vpop.f32.mrb[0].mxu0
  %v1725 = vpop.f32.mrb[0].mxu0
  %v1726 = vadd.f32 %v1437, %v1725
  %v1727 = vpop.f32.mrb[0].mxu0
  %1728 = vmatprep.mubr.bf16.mxu0 %v806
  %1729 = vmatmul.mubr.bf16.gmra.mrb[0].mxu0 %v805
  %v1730 = vpop.f32.mrb[0].mxu0
  %v1731 = vadd.f32 %v1442, %v1730
  %v1732 = vpop.f32.mrb[0].mxu0
  %v1733 = vpop.f32.mrb[0].mxu0
  %v1734 = vadd.f32 %v1445, %v1733
  %v1735 = vpop.f32.mrb[0].mxu0
  %1736 = vmatprep.mubr.bf16.mxu0 %v811
  %1737 = vmatmul.mubr.bf16.gmra.mrb[0].mxu0 %v810
  %v1738 = vpop.f32.mrb[0].mxu0
  %v1739 = vadd.f32 %v1450, %v1738
  %v1740 = vpop.f32.mrb[0].mxu0
  %v1741 = vpop.f32.mrb[0].mxu0
  %v1742 = vadd.f32 %v1453, %v1741
  %v1743 = vpop.f32.mrb[0].mxu0
  %1744 = vmatprep.mubr.bf16.mxu0 %v816
  %1745 = vmatmul.mubr.bf16.gmra.mrb[0].mxu0 %v815
  %v1746 = vpop.f32.mrb[0].mxu0
  %v1747 = vadd.f32 %v1458, %v1746
  %v1748 = vpop.f32.mrb[0].mxu0
  %v1749 = vpop.f32.mrb[0].mxu0
  %v1750 = vadd.f32 %v1461, %v1749
  %v1751 = vpop.f32.mrb[0].mxu0
  %1752 = vmatprep.mubr.bf16.mxu0 %v821
  %1753 = vmatmul.mubr.bf16.gmra.mrb[0].mxu0 %v820
  %v1754 = vpop.f32.mrb[0].mxu0
  %v1755 = vadd.f32 %v1466, %v1754
  %v1756 = vpop.f32.mrb[0].mxu0
  %v1757 = vpop.f32.mrb[0].mxu0
  %v1758 = vadd.f32 %v1469, %v1757
  %v1759 = vpop.f32.mrb[0].mxu0
  %1760 = vmatprep.mubr.bf16.mxu0 %v826
  %1761 = vmatmul.mubr.bf16.gmra.mrb[0].mxu0 %v825
  %v1762 = vpop.f32.mrb[0].mxu0
  %v1763 = vadd.f32 %v1474, %v1762
  %v1764 = vpop.f32.mrb[0].mxu0
  %v1765 = vpop.f32.mrb[0].mxu0
  %v1766 = vadd.f32 %v1477, %v1765
  %v1767 = vpop.f32.mrb[0].mxu0
  %1768 = vmatprep.mubr.bf16.mxu0 %v831
  %1769 = vmatmul.mubr.bf16.gmra.mrb[0].mxu0 %v830
  %v1770 = vpop.f32.mrb[0].mxu0
  %v1771 = vadd.f32 %v1482, %v1770
  %v1772 = vpop.f32.mrb[0].mxu0
  %v1773 = vpop.f32.mrb[0].mxu0
  %v1774 = vadd.f32 %v1485, %v1773
  %v1775 = vpop.f32.mrb[0].mxu0
  %1776 = vmatprep.mubr.bf16.mxu0 %v836
  %1777 = vmatmul.mubr.bf16.gmra.mrb[0].mxu0 %v835
  %v1778 = vpop.f32.mrb[0].mxu0
  %v1779 = vadd.f32 %v1490, %v1778
  %v1780 = vpop.f32.mrb[0].mxu0
  %v1781 = vpop.f32.mrb[0].mxu0
  %v1782 = vadd.f32 %v1493, %v1781
  %v1783 = vpop.f32.mrb[0].mxu0
  %1784 = vmatprep.mubr.bf16.mxu0 %v841
  %1785 = vmatmul.mubr.bf16.gmra.mrb[0].mxu0 %v840
  %v1786 = vpop.f32.mrb[0].mxu0
  %v1787 = vadd.f32 %v1498, %v1786
  %v1788 = vpop.f32.mrb[0].mxu0
  %v1789 = vpop.f32.mrb[0].mxu0
  %v1790 = vadd.f32 %v1501, %v1789
  %v1791 = vpop.f32.mrb[0].mxu0
  %1792 = vmatprep.mubr.bf16.mxu0 %v846
  %1793 = vmatmul.mubr.bf16.gmra.mrb[0].mxu0 %v845
  %v1794 = vpop.f32.mrb[0].mxu0
  %v1795 = vadd.f32 %v1506, %v1794
  %v1796 = vpop.f32.mrb[0].mxu0
  %v1797 = vpop.f32.mrb[0].mxu0
  %v1798 = vadd.f32 %v1509, %v1797
  %v1799 = vpop.f32.mrb[0].mxu0
  %1800 = vmatprep.mubr.bf16.mxu0 %v851
  %1801 = vmatmul.mubr.bf16.gmra.mrb[0].mxu0 %v850
  %v1802 = vpop.f32.mrb[0].mxu0
  %v1803 = vadd.f32 %v1514, %v1802
  %v1804 = vpop.f32.mrb[0].mxu0
  %v1805 = vpop.f32.mrb[0].mxu0
  %v1806 = vadd.f32 %v1517, %v1805
  %v1807 = vpop.f32.mrb[0].mxu0
  %1808 = vmatprep.mubr.bf16.mxu0 %v856
  %1809 = vmatmul.mubr.bf16.gmra.mrb[0].mxu0 %v855
  %v1810 = vpop.f32.mrb[0].mxu0
  %v1811 = vadd.f32 %v1522, %v1810
  %v1812 = vpop.f32.mrb[0].mxu0
  %v1813 = vpop.f32.mrb[0].mxu0
  %v1814 = vadd.f32 %v1525, %v1813
  %v1815 = vpop.f32.mrb[0].mxu0
  %1816 = vmatprep.mubr.bf16.mxu0 %v861
  %1817 = vmatmul.mubr.bf16.gmra.mrb[0].mxu0 %v860
  %v1818 = vpop.f32.mrb[0].mxu0
  %v1819 = vadd.f32 %v1530, %v1818
  %v1820 = vpop.f32.mrb[0].mxu0
  %v1821 = vpop.f32.mrb[0].mxu0
  %v1822 = vadd.f32 %v1533, %v1821
  %v1823 = vpop.f32.mrb[0].mxu0
  %1824 = vmatprep.mubr.bf16.mxu0 %v866
  %1825 = vmatmul.mubr.bf16.gmra.mrb[0].mxu0 %v865
  %v1826 = vpop.f32.mrb[0].mxu0
  %v1827 = vadd.f32 %v1538, %v1826
  %v1828 = vpop.f32.mrb[0].mxu0
  %v1829 = vpop.f32.mrb[0].mxu0
  %v1830 = vadd.f32 %v1541, %v1829
  %v1831 = vpop.f32.mrb[0].mxu0
  %1832 = vmatprep.mubr.bf16.mxu0 %v871
  %1833 = vmatmul.mubr.bf16.gmra.mrb[0].mxu0 %v870
  %v1834 = vpop.f32.mrb[0].mxu0
  %v1835 = vadd.f32 %v1546, %v1834
  %v1836 = vpop.f32.mrb[0].mxu0
  %v1837 = vpop.f32.mrb[0].mxu0
  %v1838 = vadd.f32 %v1549, %v1837
  %v1839 = vpop.f32.mrb[0].mxu0
  %1840 = vmatprep.mubr.bf16.mxu0 %v876
  %1841 = vmatmul.mubr.bf16.gmra.mrb[0].mxu0 %v875
  %v1842 = vpop.f32.mrb[0].mxu0
  %v1843 = vadd.f32 %v1554, %v1842
  %v1844 = vpop.f32.mrb[0].mxu0
  %v1845 = vpop.f32.mrb[0].mxu0
  %v1846 = vadd.f32 %v1557, %v1845
  %v1847 = vpop.f32.mrb[0].mxu0
  %1848 = vmatprep.mubr.bf16.mxu0 %v881
  %1849 = vmatmul.mubr.bf16.gmra.mrb[0].mxu0 %v880
  %v1850 = vpop.f32.mrb[0].mxu0
  %v1851 = vadd.f32 %v1562, %v1850
  %v1852 = vpop.f32.mrb[0].mxu0
  %v1853 = vpop.f32.mrb[0].mxu0
  %v1854 = vadd.f32 %v1565, %v1853
  %v1855 = vpop.f32.mrb[0].mxu0
  %1856 = vmatprep.mubr.bf16.mxu0 %v886
  %1857 = vmatmul.mubr.bf16.gmra.mrb[0].mxu0 %v885
  %v1858 = vpop.f32.mrb[0].mxu0
  %v1859 = vadd.f32 %v1570, %v1858
  %v1860 = vpop.f32.mrb[0].mxu0
  %v1861 = vpop.f32.mrb[0].mxu0
  %v1862 = vadd.f32 %v1573, %v1861
  %v1863 = vpop.f32.mrb[0].mxu0
  %1864 = vmatprep.mubr.bf16.mxu0 %v891
  %1865 = vmatmul.mubr.bf16.gmra.mrb[0].mxu0 %v890
  %v1866 = vpop.f32.mrb[0].mxu0
  %v1867 = vadd.f32 %v1578, %v1866
  %v1868 = vpop.f32.mrb[0].mxu0
  %v1869 = vpop.f32.mrb[0].mxu0
  %v1870 = vadd.f32 %v1581, %v1869
  %v1871 = vpop.f32.mrb[0].mxu0
  %1872 = vmatprep.mubr.bf16.mxu0 %v896
  %1873 = vmatmul.mubr.bf16.gmra.mrb[0].mxu0 %v895
  %v1874 = vpop.f32.mrb[0].mxu0
  %v1875 = vadd.f32 %v1586, %v1874
  %v1876 = vpop.f32.mrb[0].mxu0
  %v1877 = vpop.f32.mrb[0].mxu0
  %v1878 = vadd.f32 %v1589, %v1877
  %v1879 = vpop.f32.mrb[0].mxu0
  %1880 = vmatprep.mubr.bf16.mxu0 %v901
  %1881 = vmatmul.mubr.bf16.gmra.mrb[0].mxu0 %v900
  %v1882 = vpop.f32.mrb[0].mxu0
  %v1883 = vadd.f32 %v1594, %v1882
  %v1884 = vpop.f32.mrb[0].mxu0
  %v1885 = vpop.f32.mrb[0].mxu0
  %v1886 = vadd.f32 %v1597, %v1885
  %v1887 = vpop.f32.mrb[0].mxu0
  %1888 = vmatprep.mubr.bf16.mxu0 %v906
  %1889 = vmatmul.mubr.bf16.gmra.mrb[0].mxu0 %v905
  %v1890 = vpop.f32.mrb[0].mxu0
  %v1891 = vadd.f32 %v1602, %v1890
  %v1892 = vpop.f32.mrb[0].mxu0
  %v1893 = vpop.f32.mrb[0].mxu0
  %v1894 = vadd.f32 %v1605, %v1893
  %v1895 = vpop.f32.mrb[0].mxu0
  %1896 = vmatprep.mubr.bf16.mxu0 %v911
  %1897 = vmatmul.mubr.bf16.gmra.mrb[0].mxu0 %v910
  %v1898 = vpop.f32.mrb[0].mxu0
  %v1899 = vadd.f32 %v1610, %v1898
  %v1900 = vpop.f32.mrb[0].mxu0
  %v1901 = vpop.f32.mrb[0].mxu0
  %v1902 = vadd.f32 %v1613, %v1901
  %v1903 = vpop.f32.mrb[0].mxu0
  %1904 = vmatprep.mubr.bf16.mxu0 %v916
  %1905 = vmatmul.mubr.bf16.gmra.mrb[0].mxu0 %v915
  %v1906 = vpop.f32.mrb[0].mxu0
  %v1907 = vadd.f32 %v1618, %v1906
  %v1908 = vpop.f32.mrb[0].mxu0
  %v1909 = vpop.f32.mrb[0].mxu0
  %v1910 = vadd.f32 %v1621, %v1909
  %v1911 = vpop.f32.mrb[0].mxu0
  %1912 = vmatprep.mubr.bf16.mxu0 %v921
  %1913 = vmatmul.mubr.bf16.gmra.mrb[0].mxu0 %v920
  %v1914 = vpop.f32.mrb[0].mxu0
  %v1915 = vadd.f32 %v1626, %v1914
  %v1916 = vpop.f32.mrb[0].mxu0
  %v1917 = vpop.f32.mrb[0].mxu0
  %v1918 = vadd.f32 %v1629, %v1917
  %v1919 = vpop.f32.mrb[0].mxu0
  %1920 = vmatprep.mubr.bf16.mxu0 %v926
  %1921 = vmatmul.mubr.bf16.gmra.mrb[0].mxu0 %v925
  %v1922 = vpop.f32.mrb[0].mxu0
  %v1923 = vadd.f32 %v1634, %v1922
  %v1924 = vpop.f32.mrb[0].mxu0
  %v1925 = vpop.f32.mrb[0].mxu0
  %v1926 = vadd.f32 %v1637, %v1925
  %v1927 = vpop.f32.mrb[0].mxu0
  %1928 = vmatprep.mubr.bf16.mxu0 %v931
  %1929 = vmatmul.mubr.bf16.gmra.mrb[0].mxu0 %v930
  %v1930 = vpop.f32.mrb[0].mxu0
  %v1931 = vadd.f32 %v1642, %v1930
  %v1932 = vpop.f32.mrb[0].mxu0
  %v1933 = vpop.f32.mrb[0].mxu0
  %v1934 = vadd.f32 %v1645, %v1933
  %v1935 = vpop.f32.mrb[0].mxu0
  %1936 = vmatprep.mubr.bf16.mxu0 %v936
  %1937 = vmatmul.mubr.bf16.gmra.mrb[0].mxu0 %v935
  %v1938 = vpop.f32.mrb[0].mxu0
  %v1939 = vadd.f32 %v1650, %v1938
  %v1940 = vpop.f32.mrb[0].mxu0
  %v1941 = vpop.f32.mrb[0].mxu0
  %v1942 = vadd.f32 %v1653, %v1941
  %v1943 = vpop.f32.mrb[0].mxu0
  %1944 = vmatprep.mubr.bf16.mxu0 %v941
  %1945 = vmatmul.mubr.bf16.gmra.mrb[0].mxu0 %v940
  %v1946 = vpop.f32.mrb[0].mxu0
  %v1947 = vadd.f32 %v1658, %v1946
  %v1948 = vpop.f32.mrb[0].mxu0
  %v1949 = vpop.f32.mrb[0].mxu0
  %v1950 = vadd.f32 %v1661, %v1949
  %v1951 = vpop.f32.mrb[0].mxu0
  %1952 = vmatprep.mubr.bf16.mxu0 %v946
  %1953 = vmatmul.mubr.bf16.gmra.mrb[0].mxu0 %v945
  %v1954 = vpop.f32.mrb[0].mxu0
  %v1955 = vadd.f32 %v1666, %v1954
  %v1956 = vpop.f32.mrb[0].mxu0
  %v1957 = vpop.f32.mrb[0].mxu0
  %v1958 = vadd.f32 %v1669, %v1957
  %v1959 = vpop.f32.mrb[0].mxu0
  %1960 = vmatprep.mubr.bf16.mxu0 %v951
  %1961 = vmatmul.mubr.bf16.gmra.mrb[0].mxu0 %v950
  %v1962 = vpop.f32.mrb[0].mxu0
  %v1963 = vadd.f32 %v1674, %v1962
  %v1964 = vpop.f32.mrb[0].mxu0
  %v1965 = vpop.f32.mrb[0].mxu0
  %v1966 = vadd.f32 %v1677, %v1965
  %v1967 = vpop.f32.mrb[0].mxu0
  %1968 = vmatprep.mubr.bf16.mxu0 %v956
  %1969 = vmatmul.mubr.bf16.gmra.mrb[0].mxu0 %v955
  %v1970 = vpop.f32.mrb[0].mxu0
  %v1971 = vadd.f32 %v1682, %v1970
  %v1972 = vpop.f32.mrb[0].mxu0
  %v1973 = vpop.f32.mrb[0].mxu0
  %v1974 = vadd.f32 %v1685, %v1973
  %v1975 = vpop.f32.mrb[0].mxu0
  %1976 = vdwg.mxu0
  %1977 = vmatprep.subr.bf16.mxu0 0
  %1978 = vmatpush1.bf16.msra.mxu0 %v1262
  %1979 = vmatprep.subr.bf16.mxu0 0
  %1980 = vmatpush1.bf16.msra.mxu0 %v1263
  %1981 = vmatprep.subr.bf16.mxu0 0
  %1982 = vmatpush1.bf16.msra.mxu0 %v1264
  %1983 = vmatprep.subr.bf16.mxu0 0
  %1984 = vmatpush1.bf16.msra.mxu0 %v1265
  %1985 = vmatprep.subr.bf16.mxu0 0
  %1986 = vmatpush1.bf16.msra.mxu0 0
  %1987 = vmatprep.subr.bf16.mxu0 0
  %1988 = vmatpush1.bf16.msra.mxu0 0
  %1989 = vmatprep.subr.bf16.mxu0 0
  %1990 = vmatpush1.bf16.msra.mxu0 0
  %1991 = vmatprep.subr.bf16.mxu0 0
  %1992 = vmatpush1.bf16.msra.mxu0 0
  %1993 = vmatprep.subr.bf16.mxu0 0
  %1994 = vmatpush1.bf16.msra.mxu0 0
  %1995 = vmatprep.subr.bf16.mxu0 0
  %1996 = vmatpush1.bf16.msra.mxu0 0
  %1997 = vmatprep.subr.bf16.mxu0 0
  %1998 = vmatpush1.bf16.msra.mxu0 0
  %1999 = vmatprep.subr.bf16.mxu0 0
  %2000 = vmatpush1.bf16.msra.mxu0 0
  %2001 = vmatprep.subr.bf16.mxu0 0
  %2002 = vmatpush1.bf16.msra.mxu0 0
  %2003 = vmatprep.subr.bf16.mxu0 0
  %2004 = vmatpush1.bf16.msra.mxu0 0
  %2005 = vmatprep.subr.bf16.mxu0 0
  %2006 = vmatpush1.bf16.msra.mxu0 0
  %2007 = vmatprep.subr.bf16.mxu0 0
  %2008 = vmatpush1.bf16.msra.mxu0 0
  %2009 = vmatprep.mubr.bf16.mxu0 0
  %2010 = vmatmul.mubr.bf16.gmra.mrb[0].mxu0 %v1304
  %v2011 = vpop.f32.mrb[0].mxu0
  %v2012 = vadd.f32 %v1723, %v2011
  %v2013 = vpop.f32.mrb[0].mxu0
  %v2014 = vpop.f32.mrb[0].mxu0
  %v2015 = vadd.f32 %v1726, %v2014
  %v2016 = vpop.f32.mrb[0].mxu0
  %2017 = vmatprep.mubr.bf16.mxu0 0
  %2018 = vmatmul.mubr.bf16.gmra.mrb[0].mxu0 %v1307
  %v2019 = vpop.f32.mrb[0].mxu0
  %v2020 = vadd.f32 %v1731, %v2019
  %v2021 = vpop.f32.mrb[0].mxu0
  %v2022 = vpop.f32.mrb[0].mxu0
  %v2023 = vadd.f32 %v1734, %v2022
  %v2024 = vpop.f32.mrb[0].mxu0
  %2025 = vmatprep.mubr.bf16.mxu0 0
  %2026 = vmatmul.mubr.bf16.gmra.mrb[0].mxu0 %v1310
  %v2027 = vpop.f32.mrb[0].mxu0
  %v2028 = vadd.f32 %v1739, %v2027
  %v2029 = vpop.f32.mrb[0].mxu0
  %v2030 = vpop.f32.mrb[0].mxu0
  %v2031 = vadd.f32 %v1742, %v2030
  %v2032 = vpop.f32.mrb[0].mxu0
  %2033 = vmatprep.mubr.bf16.mxu0 0
  %2034 = vmatmul.mubr.bf16.gmra.mrb[0].mxu0 %v1313
  %v2035 = vpop.f32.mrb[0].mxu0
  %v2036 = vadd.f32 %v1747, %v2035
  %v2037 = vpop.f32.mrb[0].mxu0
  %v2038 = vpop.f32.mrb[0].mxu0
  %v2039 = vadd.f32 %v1750, %v2038
  %v2040 = vpop.f32.mrb[0].mxu0
  %2041 = vmatprep.mubr.bf16.mxu0 0
  %2042 = vmatmul.mubr.bf16.gmra.mrb[0].mxu0 %v1316
  %v2043 = vpop.f32.mrb[0].mxu0
  %v2044 = vadd.f32 %v1755, %v2043
  %v2045 = vpop.f32.mrb[0].mxu0
  %v2046 = vpop.f32.mrb[0].mxu0
  %v2047 = vadd.f32 %v1758, %v2046
  %v2048 = vpop.f32.mrb[0].mxu0
  %2049 = vmatprep.mubr.bf16.mxu0 0
  %2050 = vmatmul.mubr.bf16.gmra.mrb[0].mxu0 %v1319
  %v2051 = vpop.f32.mrb[0].mxu0
  %v2052 = vadd.f32 %v1763, %v2051
  %v2053 = vpop.f32.mrb[0].mxu0
  %v2054 = vpop.f32.mrb[0].mxu0
  %v2055 = vadd.f32 %v1766, %v2054
  %v2056 = vpop.f32.mrb[0].mxu0
  %2057 = vmatprep.mubr.bf16.mxu0 0
  %2058 = vmatmul.mubr.bf16.gmra.mrb[0].mxu0 %v1322
  %v2059 = vpop.f32.mrb[0].mxu0
  %v2060 = vadd.f32 %v1771, %v2059
  %v2061 = vpop.f32.mrb[0].mxu0
  %v2062 = vpop.f32.mrb[0].mxu0
  %v2063 = vadd.f32 %v1774, %v2062
  %v2064 = vpop.f32.mrb[0].mxu0
  %2065 = vmatprep.mubr.bf16.mxu0 0
  %2066 = vmatmul.mubr.bf16.gmra.mrb[0].mxu0 %v1325
  %v2067 = vpop.f32.mrb[0].mxu0
  %v2068 = vadd.f32 %v1779, %v2067
  %v2069 = vpop.f32.mrb[0].mxu0
  %v2070 = vpop.f32.mrb[0].mxu0
  %v2071 = vadd.f32 %v1782, %v2070
  %v2072 = vpop.f32.mrb[0].mxu0
  %2073 = vmatprep.mubr.bf16.mxu0 0
  %2074 = vmatmul.mubr.bf16.gmra.mrb[0].mxu0 %v1328
  %v2075 = vpop.f32.mrb[0].mxu0
  %v2076 = vadd.f32 %v1787, %v2075
  %v2077 = vpop.f32.mrb[0].mxu0
  %v2078 = vpop.f32.mrb[0].mxu0
  %v2079 = vadd.f32 %v1790, %v2078
  %v2080 = vpop.f32.mrb[0].mxu0
  %2081 = vmatprep.mubr.bf16.mxu0 0
  %2082 = vmatmul.mubr.bf16.gmra.mrb[0].mxu0 %v1331
  %v2083 = vpop.f32.mrb[0].mxu0
  %v2084 = vadd.f32 %v1795, %v2083
  %v2085 = vpop.f32.mrb[0].mxu0
  %v2086 = vpop.f32.mrb[0].mxu0
  %v2087 = vadd.f32 %v1798, %v2086
  %v2088 = vpop.f32.mrb[0].mxu0
  %2089 = vmatprep.mubr.bf16.mxu0 0
  %2090 = vmatmul.mubr.bf16.gmra.mrb[0].mxu0 %v1334
  %v2091 = vpop.f32.mrb[0].mxu0
  %v2092 = vadd.f32 %v1803, %v2091
  %v2093 = vpop.f32.mrb[0].mxu0
  %v2094 = vpop.f32.mrb[0].mxu0
  %v2095 = vadd.f32 %v1806, %v2094
  %v2096 = vpop.f32.mrb[0].mxu0
  %2097 = vmatprep.mubr.bf16.mxu0 0
  %2098 = vmatmul.mubr.bf16.gmra.mrb[0].mxu0 %v1337
  %v2099 = vpop.f32.mrb[0].mxu0
  %v2100 = vadd.f32 %v1811, %v2099
  %v2101 = vpop.f32.mrb[0].mxu0
  %v2102 = vpop.f32.mrb[0].mxu0
  %v2103 = vadd.f32 %v1814, %v2102
  %v2104 = vpop.f32.mrb[0].mxu0
  %2105 = vmatprep.mubr.bf16.mxu0 0
  %2106 = vmatmul.mubr.bf16.gmra.mrb[0].mxu0 %v1340
  %v2107 = vpop.f32.mrb[0].mxu0
  %v2108 = vadd.f32 %v1819, %v2107
  %v2109 = vpop.f32.mrb[0].mxu0
  %v2110 = vpop.f32.mrb[0].mxu0
  %v2111 = vadd.f32 %v1822, %v2110
  %v2112 = vpop.f32.mrb[0].mxu0
  %2113 = vmatprep.mubr.bf16.mxu0 0
  %2114 = vmatmul.mubr.bf16.gmra.mrb[0].mxu0 %v1343
  %v2115 = vpop.f32.mrb[0].mxu0
  %v2116 = vadd.f32 %v1827, %v2115
  %v2117 = vpop.f32.mrb[0].mxu0
  %v2118 = vpop.f32.mrb[0].mxu0
  %v2119 = vadd.f32 %v1830, %v2118
  %v2120 = vpop.f32.mrb[0].mxu0
  %2121 = vmatprep.mubr.bf16.mxu0 0
  %2122 = vmatmul.mubr.bf16.gmra.mrb[0].mxu0 %v1346
  %v2123 = vpop.f32.mrb[0].mxu0
  %v2124 = vadd.f32 %v1835, %v2123
  %v2125 = vpop.f32.mrb[0].mxu0
  %v2126 = vpop.f32.mrb[0].mxu0
  %v2127 = vadd.f32 %v1838, %v2126
  %v2128 = vpop.f32.mrb[0].mxu0
  %2129 = vmatprep.mubr.bf16.mxu0 0
  %2130 = vmatmul.mubr.bf16.gmra.mrb[0].mxu0 %v1349
  %v2131 = vpop.f32.mrb[0].mxu0
  %v2132 = vadd.f32 %v1843, %v2131
  %v2133 = vpop.f32.mrb[0].mxu0
  %v2134 = vpop.f32.mrb[0].mxu0
  %v2135 = vadd.f32 %v1846, %v2134
  %v2136 = vpop.f32.mrb[0].mxu0
  %2137 = vmatprep.mubr.bf16.mxu0 0
  %2138 = vmatmul.mubr.bf16.gmra.mrb[0].mxu0 %v1352
  %v2139 = vpop.f32.mrb[0].mxu0
  %v2140 = vadd.f32 %v1851, %v2139
  %v2141 = vpop.f32.mrb[0].mxu0
  %v2142 = vpop.f32.mrb[0].mxu0
  %v2143 = vadd.f32 %v1854, %v2142
  %v2144 = vpop.f32.mrb[0].mxu0
  %2145 = vmatprep.mubr.bf16.mxu0 0
  %2146 = vmatmul.mubr.bf16.gmra.mrb[0].mxu0 %v1355
  %v2147 = vpop.f32.mrb[0].mxu0
  %v2148 = vadd.f32 %v1859, %v2147
  %v2149 = vpop.f32.mrb[0].mxu0
  %v2150 = vpop.f32.mrb[0].mxu0
  %v2151 = vadd.f32 %v1862, %v2150
  %v2152 = vpop.f32.mrb[0].mxu0
  %2153 = vmatprep.mubr.bf16.mxu0 0
  %2154 = vmatmul.mubr.bf16.gmra.mrb[0].mxu0 %v1358
  %v2155 = vpop.f32.mrb[0].mxu0
  %v2156 = vadd.f32 %v1867, %v2155
  %v2157 = vpop.f32.mrb[0].mxu0
  %v2158 = vpop.f32.mrb[0].mxu0
  %v2159 = vadd.f32 %v1870, %v2158
  %v2160 = vpop.f32.mrb[0].mxu0
  %2161 = vmatprep.mubr.bf16.mxu0 0
  %2162 = vmatmul.mubr.bf16.gmra.mrb[0].mxu0 %v1361
  %v2163 = vpop.f32.mrb[0].mxu0
  %v2164 = vadd.f32 %v1875, %v2163
  %v2165 = vpop.f32.mrb[0].mxu0
  %v2166 = vpop.f32.mrb[0].mxu0
  %v2167 = vadd.f32 %v1878, %v2166
  %v2168 = vpop.f32.mrb[0].mxu0
  %2169 = vmatprep.mubr.bf16.mxu0 0
  %2170 = vmatmul.mubr.bf16.gmra.mrb[0].mxu0 %v1364
  %v2171 = vpop.f32.mrb[0].mxu0
  %v2172 = vadd.f32 %v1883, %v2171
  %v2173 = vpop.f32.mrb[0].mxu0
  %v2174 = vpop.f32.mrb[0].mxu0
  %v2175 = vadd.f32 %v1886, %v2174
  %v2176 = vpop.f32.mrb[0].mxu0
  %2177 = vmatprep.mubr.bf16.mxu0 0
  %2178 = vmatmul.mubr.bf16.gmra.mrb[0].mxu0 %v1367
  %v2179 = vpop.f32.mrb[0].mxu0
  %v2180 = vadd.f32 %v1891, %v2179
  %v2181 = vpop.f32.mrb[0].mxu0
  %v2182 = vpop.f32.mrb[0].mxu0
  %v2183 = vadd.f32 %v1894, %v2182
  %v2184 = vpop.f32.mrb[0].mxu0
  %2185 = vmatprep.mubr.bf16.mxu0 0
  %2186 = vmatmul.mubr.bf16.gmra.mrb[0].mxu0 %v1370
  %v2187 = vpop.f32.mrb[0].mxu0
  %v2188 = vadd.f32 %v1899, %v2187
  %v2189 = vpop.f32.mrb[0].mxu0
  %v2190 = vpop.f32.mrb[0].mxu0
  %v2191 = vadd.f32 %v1902, %v2190
  %v2192 = vpop.f32.mrb[0].mxu0
  %2193 = vmatprep.mubr.bf16.mxu0 0
  %2194 = vmatmul.mubr.bf16.gmra.mrb[0].mxu0 %v1373
  %v2195 = vpop.f32.mrb[0].mxu0
  %v2196 = vadd.f32 %v1907, %v2195
  %v2197 = vpop.f32.mrb[0].mxu0
  %v2198 = vpop.f32.mrb[0].mxu0
  %v2199 = vadd.f32 %v1910, %v2198
  %v2200 = vpop.f32.mrb[0].mxu0
  %2201 = vmatprep.mubr.bf16.mxu0 0
  %2202 = vmatmul.mubr.bf16.gmra.mrb[0].mxu0 %v1376
  %v2203 = vpop.f32.mrb[0].mxu0
  %v2204 = vadd.f32 %v1915, %v2203
  %v2205 = vpop.f32.mrb[0].mxu0
  %v2206 = vpop.f32.mrb[0].mxu0
  %v2207 = vadd.f32 %v1918, %v2206
  %v2208 = vpop.f32.mrb[0].mxu0
  %2209 = vmatprep.mubr.bf16.mxu0 0
  %2210 = vmatmul.mubr.bf16.gmra.mrb[0].mxu0 %v1379
  %v2211 = vpop.f32.mrb[0].mxu0
  %v2212 = vadd.f32 %v1923, %v2211
  %v2213 = vpop.f32.mrb[0].mxu0
  %v2214 = vpop.f32.mrb[0].mxu0
  %v2215 = vadd.f32 %v1926, %v2214
  %v2216 = vpop.f32.mrb[0].mxu0
  %2217 = vmatprep.mubr.bf16.mxu0 0
  %2218 = vmatmul.mubr.bf16.gmra.mrb[0].mxu0 %v1382
  %v2219 = vpop.f32.mrb[0].mxu0
  %v2220 = vadd.f32 %v1931, %v2219
  %v2221 = vpop.f32.mrb[0].mxu0
  %v2222 = vpop.f32.mrb[0].mxu0
  %v2223 = vadd.f32 %v1934, %v2222
  %v2224 = vpop.f32.mrb[0].mxu0
  %2225 = vmatprep.mubr.bf16.mxu0 0
  %2226 = vmatmul.mubr.bf16.gmra.mrb[0].mxu0 %v1385
  %v2227 = vpop.f32.mrb[0].mxu0
  %v2228 = vadd.f32 %v1939, %v2227
  %v2229 = vpop.f32.mrb[0].mxu0
  %v2230 = vpop.f32.mrb[0].mxu0
  %v2231 = vadd.f32 %v1942, %v2230
  %v2232 = vpop.f32.mrb[0].mxu0
  %2233 = vmatprep.mubr.bf16.mxu0 0
  %2234 = vmatmul.mubr.bf16.gmra.mrb[0].mxu0 %v1388
  %v2235 = vpop.f32.mrb[0].mxu0
  %v2236 = vadd.f32 %v1947, %v2235
  %v2237 = vpop.f32.mrb[0].mxu0
  %v2238 = vpop.f32.mrb[0].mxu0
  %v2239 = vadd.f32 %v1950, %v2238
  %v2240 = vpop.f32.mrb[0].mxu0
  %2241 = vmatprep.mubr.bf16.mxu0 0
  %2242 = vmatmul.mubr.bf16.gmra.mrb[0].mxu0 %v1391
  %v2243 = vpop.f32.mrb[0].mxu0
  %v2244 = vadd.f32 %v1955, %v2243
  %v2245 = vpop.f32.mrb[0].mxu0
  %v2246 = vpop.f32.mrb[0].mxu0
  %v2247 = vadd.f32 %v1958, %v2246
  %v2248 = vpop.f32.mrb[0].mxu0
  %2249 = vmatprep.mubr.bf16.mxu0 0
  %2250 = vmatmul.mubr.bf16.gmra.mrb[0].mxu0 %v1394
  %v2251 = vpop.f32.mrb[0].mxu0
  %v2252 = vadd.f32 %v1963, %v2251
  %v2253 = vpop.f32.mrb[0].mxu0
  %v2254 = vpop.f32.mrb[0].mxu0
  %v2255 = vadd.f32 %v1966, %v2254
  %v2256 = vpop.f32.mrb[0].mxu0
  %2257 = vmatprep.mubr.bf16.mxu0 0
  %2258 = vmatmul.mubr.bf16.gmra.mrb[0].mxu0 %v1397
  %v2259 = vpop.f32.mrb[0].mxu0
  %v2260 = vadd.f32 %v1971, %v2259
  %v2261 = vpop.f32.mrb[0].mxu0
  %v2262 = vpop.f32.mrb[0].mxu0
  %v2263 = vadd.f32 %v1974, %v2262
  %v2264 = vpop.f32.mrb[0].mxu0
  %2265 = vdwg.mxu0
  %v2266 = vmax.f32 %v2012, 0.0
  %v2267 = vmax.f32 %v2015, 0.0
  %v2268 = vmax.f32 %v2020, 0.0
  %v2269 = vmax.f32 %v2023, 0.0
  %v2270 = vmax.f32 %v2028, 0.0
  %v2271 = vmax.f32 %v2031, 0.0
  %v2272 = vmax.f32 %v2036, 0.0
  %v2273 = vmax.f32 %v2039, 0.0
  %v2274 = vmax.f32 %v2044, 0.0
  %v2275 = vmax.f32 %v2047, 0.0
  %v2276 = vmax.f32 %v2052, 0.0
  %v2277 = vmax.f32 %v2055, 0.0
  %v2278 = vmax.f32 %v2060, 0.0
  %v2279 = vmax.f32 %v2063, 0.0
  %v2280 = vmax.f32 %v2068, 0.0
  %v2281 = vmax.f32 %v2071, 0.0
  %v2282 = vmax.f32 %v2076, 0.0
  %v2283 = vmax.f32 %v2079, 0.0
  %v2284 = vmax.f32 %v2084, 0.0
  %v2285 = vmax.f32 %v2087, 0.0
  %v2286 = vmax.f32 %v2092, 0.0
  %v2287 = vmax.f32 %v2095, 0.0
  %v2288 = vmax.f32 %v2100, 0.0
  %v2289 = vmax.f32 %v2103, 0.0
  %v2290 = vmax.f32 %v2108, 0.0
  %v2291 = vmax.f32 %v2111, 0.0
  %v2292 = vmax.f32 %v2116, 0.0
  %v2293 = vmax.f32 %v2119, 0.0
  %v2294 = vmax.f32 %v2124, 0.0
  %v2295 = vmax.f32 %v2127, 0.0
  %v2296 = vmax.f32 %v2132, 0.0
  %v2297 = vmax.f32 %v2135, 0.0
  %v2298 = vmax.f32 %v2140, 0.0
  %v2299 = vmax.f32 %v2143, 0.0
  %v2300 = vmax.f32 %v2148, 0.0
  %v2301 = vmax.f32 %v2151, 0.0
  %v2302 = vmax.f32 %v2156, 0.0
  %v2303 = vmax.f32 %v2159, 0.0
  %v2304 = vmax.f32 %v2164, 0.0
  %v2305 = vmax.f32 %v2167, 0.0
  %v2306 = vmax.f32 %v2172, 0.0
  %v2307 = vmax.f32 %v2175, 0.0
  %v2308 = vmax.f32 %v2180, 0.0
  %v2309 = vmax.f32 %v2183, 0.0
  %v2310 = vmax.f32 %v2188, 0.0
  %v2311 = vmax.f32 %v2191, 0.0
  %v2312 = vmax.f32 %v2196, 0.0
  %v2313 = vmax.f32 %v2199, 0.0
  %v2314 = vmax.f32 %v2204, 0.0
  %v2315 = vmax.f32 %v2207, 0.0
  %v2316 = vmax.f32 %v2212, 0.0
  %v2317 = vmax.f32 %v2215, 0.0
  %v2318 = vmax.f32 %v2220, 0.0
  %v2319 = vmax.f32 %v2223, 0.0
  %v2320 = vmax.f32 %v2228, 0.0
  %v2321 = vmax.f32 %v2231, 0.0
  %v2322 = vmax.f32 %v2236, 0.0
  %v2323 = vmax.f32 %v2239, 0.0
  %v2324 = vmax.f32 %v2244, 0.0
  %v2325 = vmax.f32 %v2247, 0.0
  %v2326 = vmax.f32 %v2252, 0.0
  %v2327 = vmax.f32 %v2255, 0.0
  %v2328 = vmax.f32 %v2260, 0.0
  %v2329 = vmax.f32 %v2263, 0.0
  %2330 = vst.msk [vmem:[%s3] sm:$0xff] %vm1302, %v2266
  %2331 = vst.msk [vmem:[%s3 + $0x8] sm:$0xff] %vm1302, %v2267
  %2332 = vst.msk [vmem:[%s3 + $0x10] sm:$0xff] %vm1302, %v2268
  %2333 = vst.msk [vmem:[%s3 + $0x18] sm:$0xff] %vm1302, %v2269
  %2334 = vst.msk [vmem:[%s3 + $0x20] sm:$0xff] %vm1302, %v2270
  %2335 = vst.msk [vmem:[%s3 + $0x28] sm:$0xff] %vm1302, %v2271
  %2336 = vst.msk [vmem:[%s3 + $0x30] sm:$0xff] %vm1302, %v2272
  %2337 = vst.msk [vmem:[%s3 + $0x38] sm:$0xff] %vm1302, %v2273
  %2338 = vst.msk [vmem:[%s3 + $0x40] sm:$0xff] %vm1302, %v2274
  %2339 = vst.msk [vmem:[%s3 + $0x48] sm:$0xff] %vm1302, %v2275
  %2340 = vst.msk [vmem:[%s3 + $0x50] sm:$0xff] %vm1302, %v2276
  %2341 = vst.msk [vmem:[%s3 + $0x58] sm:$0xff] %vm1302, %v2277
  %2342 = vst.msk [vmem:[%s3 + $0x60] sm:$0xff] %vm1302, %v2278
  %2343 = vst.msk [vmem:[%s3 + $0x68] sm:$0xff] %vm1302, %v2279
  %2344 = vst.msk [vmem:[%s3 + $0x70] sm:$0xff] %vm1302, %v2280
  %2345 = vst.msk [vmem:[%s3 + $0x78] sm:$0xff] %vm1302, %v2281
  %2346 = vst.msk [vmem:[%s3 + $0x80] sm:$0xff] %vm1302, %v2282
  %2347 = vst.msk [vmem:[%s3 + $0x88] sm:$0xff] %vm1302, %v2283
  %2348 = vst.msk [vmem:[%s3 + $0x90] sm:$0xff] %vm1302, %v2284
  %2349 = vst.msk [vmem:[%s3 + $0x98] sm:$0xff] %vm1302, %v2285
  %2350 = vst.msk [vmem:[%s3 + $0xa0] sm:$0xff] %vm1302, %v2286
  %2351 = vst.msk [vmem:[%s3 + $0xa8] sm:$0xff] %vm1302, %v2287
  %2352 = vst.msk [vmem:[%s3 + $0xb0] sm:$0xff] %vm1302, %v2288
  %2353 = vst.msk [vmem:[%s3 + $0xb8] sm:$0xff] %vm1302, %v2289
  %2354 = vst.msk [vmem:[%s3 + $0xc0] sm:$0xff] %vm1302, %v2290
  %2355 = vst.msk [vmem:[%s3 + $0xc8] sm:$0xff] %vm1302, %v2291
  %2356 = vst.msk [vmem:[%s3 + $0xd0] sm:$0xff] %vm1302, %v2292
  %2357 = vst.msk [vmem:[%s3 + $0xd8] sm:$0xff] %vm1302, %v2293
  %2358 = vst.msk [vmem:[%s3 + $0xe0] sm:$0xff] %vm1302, %v2294
  %2359 = vst.msk [vmem:[%s3 + $0xe8] sm:$0xff] %vm1302, %v2295
  %2360 = vst.msk [vmem:[%s3 + $0xf0] sm:$0xff] %vm1302, %v2296
  %2361 = vst.msk [vmem:[%s3 + $0xf8] sm:$0xff] %vm1302, %v2297
  %2362 = vst.msk [vmem:[%s3 + $0x100] sm:$0xff] %vm1302, %v2298
  %2363 = vst.msk [vmem:[%s3 + $0x108] sm:$0xff] %vm1302, %v2299
  %2364 = vst.msk [vmem:[%s3 + $0x110] sm:$0xff] %vm1302, %v2300
  %2365 = vst.msk [vmem:[%s3 + $0x118] sm:$0xff] %vm1302, %v2301
  %2366 = vst.msk [vmem:[%s3 + $0x120] sm:$0xff] %vm1302, %v2302
  %2367 = vst.msk [vmem:[%s3 + $0x128] sm:$0xff] %vm1302, %v2303
  %2368 = vst.msk [vmem:[%s3 + $0x130] sm:$0xff] %vm1302, %v2304
  %2369 = vst.msk [vmem:[%s3 + $0x138] sm:$0xff] %vm1302, %v2305
  %2370 = vst.msk [vmem:[%s3 + $0x140] sm:$0xff] %vm1302, %v2306
  %2371 = vst.msk [vmem:[%s3 + $0x148] sm:$0xff] %vm1302, %v2307
  %2372 = vst.msk [vmem:[%s3 + $0x150] sm:$0xff] %vm1302, %v2308
  %2373 = vst.msk [vmem:[%s3 + $0x158] sm:$0xff] %vm1302, %v2309
  %2374 = vst.msk [vmem:[%s3 + $0x160] sm:$0xff] %vm1302, %v2310
  %2375 = vst.msk [vmem:[%s3 + $0x168] sm:$0xff] %vm1302, %v2311
  %2376 = vst.msk [vmem:[%s3 + $0x170] sm:$0xff] %vm1302, %v2312
  %2377 = vst.msk [vmem:[%s3 + $0x178] sm:$0xff] %vm1302, %v2313
  %2378 = vst.msk [vmem:[%s3 + $0x180] sm:$0xff] %vm1302, %v2314
  %2379 = vst.msk [vmem:[%s3 + $0x188] sm:$0xff] %vm1302, %v2315
  %2380 = vst.msk [vmem:[%s3 + $0x190] sm:$0xff] %vm1302, %v2316
  %2381 = vst.msk [vmem:[%s3 + $0x198] sm:$0xff] %vm1302, %v2317
  %2382 = vst.msk [vmem:[%s3 + $0x1a0] sm:$0xff] %vm1302, %v2318
  %2383 = vst.msk [vmem:[%s3 + $0x1a8] sm:$0xff] %vm1302, %v2319
  %2384 = vst.msk [vmem:[%s3 + $0x1b0] sm:$0xff] %vm1302, %v2320
  %2385 = vst.msk [vmem:[%s3 + $0x1b8] sm:$0xff] %vm1302, %v2321
  %2386 = vst.msk [vmem:[%s3 + $0x1c0] sm:$0xff] %vm1302, %v2322
  %2387 = vst.msk [vmem:[%s3 + $0x1c8] sm:$0xff] %vm1302, %v2323
  %2388 = vst.msk [vmem:[%s3 + $0x1d0] sm:$0xff] %vm1302, %v2324
  %2389 = vst.msk [vmem:[%s3 + $0x1d8] sm:$0xff] %vm1302, %v2325
  %2390 = vst.msk [vmem:[%s3 + $0x1e0] sm:$0xff] %vm1302, %v2326
  %2391 = vst.msk [vmem:[%s3 + $0x1e8] sm:$0xff] %vm1302, %v2327
  %2392 = vst.msk [vmem:[%s3 + $0x1f0] sm:$0xff] %vm1302, %v2328
  %2393 = vst.msk [vmem:[%s3 + $0x1f8] sm:$0xff] %vm1302, %v2329
  // Predicated region
  $region14: #{tpu_custom_call.1} parent=0 // pred_check
    _
  $region15: #{tpu_custom_call.1} parent=0 // pred_check_branch
    %2395 = sbr.rel (0) target = $region17
  $region16: #{tpu_custom_call.1} parent=0 // pred_region
    _
  $region17: #{tpu_custom_call.1} parent=0 // pred_fallthru
    _
  // Predicated region
  $region18: #{tpu_custom_call.1} parent=0 // pred_check
    _
  $region19: #{tpu_custom_call.1} parent=0 // pred_check_branch
    %2397 = sbr.rel (0) target = $region21
  $region20: #{tpu_custom_call.1} parent=0 // pred_region
    _
  $region21: #{tpu_custom_call.1} parent=0 // pred_fallthru
    _

</llo_original>
